<compile_context>
chip_gen: v5e
topology: v5e:2x2
jax: 0.10.0
libtpu: 0.0.40
codegen_flags: <defaults>
</compile_context>

<pallas_src>
import functools

import jax
import jax.numpy as jnp
import numpy as np
from jax.experimental import pallas as pl
from jax.experimental.pallas import tpu as pltpu


def _round_up(x, m):
    return ((x + m - 1) // m) * m


def _vmem_bytes(tb, cin, tn):
    """Estimated VMEM footprint (double-buffered inputs/outputs + scratch)."""
    return (2 * tb * cin * 2          # x tile (bf16, 2 bufs)
            + 2 * cin * 512 * 2       # w1 (bf16, resident but budget 2 bufs)
            + 2 * 512 * 4             # b1
            + 2 * 512 * 1024 * 2      # w2
            + 2 * 1024 * 4            # b2
            + 2 * 1024 * tn * 2       # w3 panel (bf16, 2 bufs)
            + 2 * tn * 4              # b3 panel
            + 2 * tb * tn * 4         # out tile (f32, 2 bufs)
            + tb * 1024 * 2)          # h2 scratch (bf16)


def decoder_kernel(x_ref, w1_ref, b1_ref, w2_ref, b2_ref, w3_ref, b3_ref,
                   o_ref, h2_ref):
    # Layers 1+2 are computed once per batch tile (Dout axis is innermost).
    @pl.when(pl.program_id(1) == 0)
    def _():
        # (TB, Cin)bf16 @ (Cin, 512)bf16 -> f32
        h1 = jnp.dot(x_ref[...], w1_ref[...],
                     preferred_element_type=jnp.float32)
        h1 = jnp.maximum(h1 + b1_ref[...], 0.0)
        # (TB, 512)bf16 @ (512, 1024)bf16 -> f32
        h2 = jnp.dot(h1.astype(jnp.bfloat16), w2_ref[...],
                     preferred_element_type=jnp.float32)
        h2_ref[...] = jnp.maximum(h2 + b2_ref[...], 0.0).astype(jnp.bfloat16)

    # Layer 3, streamed over Dout panels: (TB, 1024)bf16 @ (1024, TN)bf16 -> f32
    z = jnp.dot(h2_ref[...], w3_ref[...], preferred_element_type=jnp.float32)
    o_ref[...] = jax.nn.sigmoid(z + b3_ref[...])


@functools.partial(jax.jit, static_argnames=("output_channels",))
def decoder_forward(x, params, output_channels):
    """x: (..., Cin) f32/bf16. params: bf16 (fan_in, fan_out) weights, f32 (1, fan_out) biases."""
    w1, b1, w2, b2, w3, b3 = params
    cin = x.shape[-1]
    x2 = x.reshape(-1, cin)               # Linear acts on the last dim
    B = x2.shape[0]
    dout = w3.shape[1]

    # ---- tiling / padding -------------------------------------------------
    tb = min(128, _round_up(B, 8))        # batch tile (multiple of 8 sublanes)
    b_pad = _round_up(B, tb)
    dout_pad = _round_up(dout, 128)       # lane-dense output / full MXU panels
    tn = 128
    for cand in (2048, 1024, 512, 256, 128):
        if dout_pad % cand == 0 and _vmem_bytes(tb, cin, cand) <= 40 * 1024 * 1024:
            tn = cand
            break
    grid = (b_pad // tb, dout_pad // tn)

    xb = x2.astype(jnp.bfloat16)
    if b_pad != B:
        xb = jnp.pad(xb, ((0, b_pad - B), (0, 0)))
    if dout_pad != dout:
        w3 = jnp.pad(w3, ((0, 0), (0, dout_pad - dout)))
        b3 = jnp.pad(b3, ((0, 0), (0, dout_pad - dout)))

    # ---- advisory cost estimate -------------------------------------------
    flops = 2 * b_pad * (cin * 512 + 512 * 1024 + 1024 * dout_pad)
    bytes_accessed = (
        b_pad * cin * 2                                    # x (bf16)
        + (cin * 512 + 512 * 1024 + 1024 * dout_pad) * 2   # weights (bf16)
        + (512 + 1024 + dout_pad) * 4                      # biases (f32)
        + b_pad * dout_pad * 4                             # output (f32)
    )
    cost = pl.CostEstimate(flops=flops,
                           transcendentals=b_pad * dout_pad,
                           bytes_accessed=bytes_accessed)

    vmem_limit = min(64 * 1024 * 1024,
                     max(32 * 1024 * 1024, int(1.5 * _vmem_bytes(tb, cin, tn))))

    out = pl.pallas_call(
        decoder_kernel,
        out_shape=jax.ShapeDtypeStruct((b_pad, dout_pad), jnp.float32),
        grid_spec=pltpu.PrefetchScalarGridSpec(
            num_scalar_prefetch=0,
            grid=grid,
            in_specs=[
                pl.BlockSpec((tb, cin), lambda b, n: (b, 0)),       # x tile
                pl.BlockSpec((cin, 512), lambda b, n: (0, 0)),      # w1 (resident)
                pl.BlockSpec((1, 512), lambda b, n: (0, 0)),        # b1 (resident)
                pl.BlockSpec((512, 1024), lambda b, n: (0, 0)),     # w2 (resident)
                pl.BlockSpec((1, 1024), lambda b, n: (0, 0)),       # b2 (resident)
                pl.BlockSpec((1024, tn), lambda b, n: (0, n)),      # w3 panel
                pl.BlockSpec((1, tn), lambda b, n: (0, n)),         # b3 panel
            ],
            out_specs=pl.BlockSpec((tb, tn), lambda b, n: (b, n)),
            scratch_shapes=[pltpu.VMEM((tb, 1024), jnp.bfloat16)],  # staged h2
        ),
        compiler_params=pltpu.CompilerParams(
            dimension_semantics=("parallel", "arbitrary"),
            vmem_limit_bytes=vmem_limit,
        ),
        cost_estimate=cost,
    )(xb, w1, b1, w2, b2, w3, b3)

    # strip padding, then view(-1, C, H, W)
    return out[:B, :dout].reshape(-1, *output_channels)


def init_params(key, input_channels, output_channels):
    """PyTorch-style uniform(+/-1/sqrt(fan_in)) init.

    Weights stored transposed vs. torch as (fan_in, fan_out) in bf16 so the
    kernel computes x @ W on the MXU; biases kept f32 with shape (1, fan_out).
    """
    dout = output_channels[0] * output_channels[1] * output_channels[2]
    dims = [(input_channels, 512), (512, 1024), (1024, dout)]
    params = []
    for fan_in, fan_out in dims:
        key, kw, kb = jax.random.split(key, 3)
        bound = 1.0 / np.sqrt(fan_in)
        w = jax.random.uniform(kw, (fan_in, fan_out), jnp.float32, -bound, bound)
        b = jax.random.uniform(kb, (1, fan_out), jnp.float32, -bound, bound)
        params.extend([w.astype(jnp.bfloat16), b])
    return tuple(params)


def decoder_reference(x, params, output_channels):
    """Pure-JAX reference mirroring the kernel's bf16-in / f32-accumulate math."""
    w1, b1, w2, b2, w3, b3 = params
    xb = x.reshape(-1, x.shape[-1]).astype(jnp.bfloat16)
    h1 = jnp.maximum(
        jnp.dot(xb, w1, preferred_element_type=jnp.float32) + b1, 0.0)
    h2 = jnp.maximum(
        jnp.dot(h1.astype(jnp.bfloat16), w2,
                preferred_element_type=jnp.float32) + b2, 0.0)
    z = jax.nn.sigmoid(
        jnp.dot(h2.astype(jnp.bfloat16), w3,
                preferred_element_type=jnp.float32) + b3)
    return z.reshape(-1, *output_channels)


if __name__ == "__main__":
    key = jax.random.PRNGKey(0)
    batch = 2
    input_channels = 32
    output_channels = (4, 4, 4)   # final linear has 64 outputs -> (B, 4, 4, 4)

    key, kx = jax.random.split(key)
    x = jax.random.normal(kx, (batch, input_channels), jnp.float32)
    params = init_params(key, input_channels, output_channels)

    y = decoder_forward(x, params, output_channels)
    y = jax.block_until_ready(y)

    y_ref = decoder_reference(x, params, output_channels)
    assert y.shape == (batch, *output_channels), y.shape
    np.testing.assert_allclose(np.asarray(y), np.asarray(y_ref),
                               rtol=2e-2, atol=2e-2)

    print("KERNEL_OK")
</pallas_src>

<mosaic_0001>
module attributes {stable_mosaic.version = 11 : i64} {
  func.func @decoder_kernel(%arg0: i32, %arg1: i32, %arg2: memref<8x32xbf16, #tpu.memory_space<vmem>>, %arg3: memref<32x512xbf16, #tpu.memory_space<vmem>>, %arg4: memref<1x512xf32, #tpu.memory_space<vmem>>, %arg5: memref<512x1024xbf16, #tpu.memory_space<vmem>>, %arg6: memref<1x1024xf32, #tpu.memory_space<vmem>>, %arg7: memref<1024x128xbf16, #tpu.memory_space<vmem>>, %arg8: memref<1x128xf32, #tpu.memory_space<vmem>>, %arg9: memref<8x128xf32, #tpu.memory_space<vmem>>, %arg10: memref<8x1024xbf16, #tpu.memory_space<vmem>>) attributes {dimension_semantics = [#tpu.dimension_semantics<parallel>, #tpu.dimension_semantics<arbitrary>], iteration_bounds = array<i64: 1, 1>, scalar_prefetch = 0 : i64, scratch_operands = 1 : i64, tpu.core_type = #tpu.core_type<tc>, window_params = [{transform_indices = @transform_0, window_bounds = array<i64: 8, 32>}, {pipeline_mode = #tpu.pipeline_mode<synchronous>, transform_indices = @transform_1, window_bounds = array<i64: 32, 512>}, {pipeline_mode = #tpu.pipeline_mode<synchronous>, transform_indices = @transform_2, window_bounds = array<i64: 1, 512>}, {pipeline_mode = #tpu.pipeline_mode<synchronous>, transform_indices = @transform_3, window_bounds = array<i64: 512, 1024>}, {pipeline_mode = #tpu.pipeline_mode<synchronous>, transform_indices = @transform_4, window_bounds = array<i64: 1, 1024>}, {transform_indices = @transform_5, window_bounds = array<i64: 1024, 128>}, {transform_indices = @transform_6, window_bounds = array<i64: 1, 128>}, {transform_indices = @transform_7, window_bounds = array<i64: 8, 128>}]} {
    %c0_i32 = arith.constant 0 : i32
    %0 = arith.cmpi eq, %arg1, %c0_i32 : i32
    %1 = arith.extui %0 : i1 to i32
    %c0_i32_0 = arith.constant 0 : i32
    %2 = arith.cmpi ne, %1, %c0_i32_0 : i32
    scf.if %2 {
      %c0_9 = arith.constant 0 : index
      %c0_10 = arith.constant 0 : index
      %15 = vector.load %arg2[%c0_9, %c0_10] : memref<8x32xbf16, #tpu.memory_space<vmem>>, vector<8x32xbf16>
      %c0_11 = arith.constant 0 : index
      %c0_12 = arith.constant 0 : index
      %16 = vector.load %arg3[%c0_11, %c0_12] : memref<32x512xbf16, #tpu.memory_space<vmem>>, vector<32x512xbf16>
      %cst_13 = arith.constant dense<0.000000e+00> : vector<8x512xf32>
      %17 = tpu.matmul %15, %16, %cst_13 {dimension_numbers = #tpu.dot_dimension_numbers<[1], [0], [0], [1], [0, 0, 1, 1], [], []>} : vector<8x32xbf16>, vector<32x512xbf16>, vector<8x512xf32> -> vector<8x512xf32>
      %c0_14 = arith.constant 0 : index
      %c0_15 = arith.constant 0 : index
      %18 = vector.load %arg4[%c0_14, %c0_15] : memref<1x512xf32, #tpu.memory_space<vmem>>, vector<1x512xf32>
      %19 = vector.broadcast %18 : vector<1x512xf32> to vector<8x512xf32>
      %20 = arith.addf %17, %19 : vector<8x512xf32>
      %cst_16 = arith.constant 0.000000e+00 : f32
      %21 = vector.broadcast %cst_16 : f32 to vector<8x512xf32>
      %22 = arith.maximumf %20, %21 : vector<8x512xf32>
      %23 = arith.truncf %22 : vector<8x512xf32> to vector<8x512xbf16>
      %c0_17 = arith.constant 0 : index
      %c0_18 = arith.constant 0 : index
      %24 = vector.load %arg5[%c0_17, %c0_18] : memref<512x1024xbf16, #tpu.memory_space<vmem>>, vector<512x1024xbf16>
      %cst_19 = arith.constant dense<0.000000e+00> : vector<8x1024xf32>
      %25 = tpu.matmul %23, %24, %cst_19 {dimension_numbers = #tpu.dot_dimension_numbers<[1], [0], [0], [1], [0, 0, 1, 1], [], []>} : vector<8x512xbf16>, vector<512x1024xbf16>, vector<8x1024xf32> -> vector<8x1024xf32>
      %c0_20 = arith.constant 0 : index
      %c0_21 = arith.constant 0 : index
      %26 = vector.load %arg6[%c0_20, %c0_21] : memref<1x1024xf32, #tpu.memory_space<vmem>>, vector<1x1024xf32>
      %27 = vector.broadcast %26 : vector<1x1024xf32> to vector<8x1024xf32>
      %28 = arith.addf %25, %27 : vector<8x1024xf32>
      %cst_22 = arith.constant 0.000000e+00 : f32
      %29 = vector.broadcast %cst_22 : f32 to vector<8x1024xf32>
      %30 = arith.maximumf %28, %29 : vector<8x1024xf32>
      %31 = arith.truncf %30 : vector<8x1024xf32> to vector<8x1024xbf16>
      %c0_23 = arith.constant 0 : index
      %c0_24 = arith.constant 0 : index
      %32 = vector.load %arg10[%c0_23, %c0_24] : memref<8x1024xbf16, #tpu.memory_space<vmem>>, vector<8x1024xbf16>
      tpu.vector_store %arg10[%c0_23, %c0_24], %31 {strides = array<i32>} : memref<8x1024xbf16, #tpu.memory_space<vmem>>, vector<8x1024xbf16>,
    } else {
    }
    %c0 = arith.constant 0 : index
    %c0_1 = arith.constant 0 : index
    %3 = vector.load %arg10[%c0, %c0_1] : memref<8x1024xbf16, #tpu.memory_space<vmem>>, vector<8x1024xbf16>
    %c0_2 = arith.constant 0 : index
    %c0_3 = arith.constant 0 : index
    %4 = vector.load %arg7[%c0_2, %c0_3] : memref<1024x128xbf16, #tpu.memory_space<vmem>>, vector<1024x128xbf16>
    %cst = arith.constant dense<0.000000e+00> : vector<8x128xf32>
    %5 = tpu.matmul %3, %4, %cst {dimension_numbers = #tpu.dot_dimension_numbers<[1], [0], [0], [1], [0, 0, 1, 1], [], []>} : vector<8x1024xbf16>, vector<1024x128xbf16>, vector<8x128xf32> -> vector<8x128xf32>
    %c0_4 = arith.constant 0 : index
    %c0_5 = arith.constant 0 : index
    %6 = vector.load %arg8[%c0_4, %c0_5] : memref<1x128xf32, #tpu.memory_space<vmem>>, vector<1x128xf32>
    %7 = vector.broadcast %6 : vector<1x128xf32> to vector<8x128xf32>
    %8 = arith.addf %5, %7 : vector<8x128xf32>
    %9 = arith.negf %8 : vector<8x128xf32>
    %10 = math.exp %9 : vector<8x128xf32>
    %cst_6 = arith.constant 1.000000e+00 : f32
    %11 = vector.broadcast %cst_6 : f32 to vector<8x128xf32>
    %12 = arith.addf %11, %10 : vector<8x128xf32>
    %13 = arith.divf %11, %12 : vector<8x128xf32>
    %c0_7 = arith.constant 0 : index
    %c0_8 = arith.constant 0 : index
    %14 = vector.load %arg9[%c0_7, %c0_8] : memref<8x128xf32, #tpu.memory_space<vmem>>, vector<8x128xf32>
    tpu.vector_store %arg9[%c0_7, %c0_8], %13 {strides = array<i32>} : memref<8x128xf32, #tpu.memory_space<vmem>>, vector<8x128xf32>,
    return
  }
  func.func @transform_0(%arg0: i32, %arg1: i32) -> (i32, i32) {
    %c0_i32 = arith.constant 0 : i32
    %c0_i32_0 = arith.constant 0 : i32
    return %arg0, %c0_i32 : i32, i32
  }
  func.func @transform_1(%arg0: i32, %arg1: i32) -> (i32, i32) {
    %c0_i32 = arith.constant 0 : i32
    %c0_i32_0 = arith.constant 0 : i32
    %c0_i32_1 = arith.constant 0 : i32
    return %c0_i32, %c0_i32_0 : i32, i32
  }
  func.func @transform_2(%arg0: i32, %arg1: i32) -> (i32, i32) {
    %c0_i32 = arith.constant 0 : i32
    %c0_i32_0 = arith.constant 0 : i32
    %c0_i32_1 = arith.constant 0 : i32
    return %c0_i32, %c0_i32_0 : i32, i32
  }
  func.func @transform_3(%arg0: i32, %arg1: i32) -> (i32, i32) {
    %c0_i32 = arith.constant 0 : i32
    %c0_i32_0 = arith.constant 0 : i32
    %c0_i32_1 = arith.constant 0 : i32
    return %c0_i32, %c0_i32_0 : i32, i32
  }
  func.func @transform_4(%arg0: i32, %arg1: i32) -> (i32, i32) {
    %c0_i32 = arith.constant 0 : i32
    %c0_i32_0 = arith.constant 0 : i32
    %c0_i32_1 = arith.constant 0 : i32
    return %c0_i32, %c0_i32_0 : i32, i32
  }
  func.func @transform_5(%arg0: i32, %arg1: i32) -> (i32, i32) {
    %c0_i32 = arith.constant 0 : i32
    %c0_i32_0 = arith.constant 0 : i32
    return %c0_i32, %arg1 : i32, i32
  }
  func.func @transform_6(%arg0: i32, %arg1: i32) -> (i32, i32) {
    %c0_i32 = arith.constant 0 : i32
    %c0_i32_0 = arith.constant 0 : i32
    return %c0_i32, %arg1 : i32, i32
  }
  func.func @transform_7(%arg0: i32, %arg1: i32) -> (i32, i32) {
    %c0_i32 = arith.constant 0 : i32
    return %arg0, %arg1 : i32, i32
  }
}

</mosaic_0001>

<llo_original>
// kernel: decoder_forward.1
$region0: #{decoder_forward.1}
  #allocation0 [shape = 'u32[]', space=smem, size = 0x4, offset = 0x4, fixed_abs, tag = 'smem constant byte address 0x4 - core index']
  #allocation1 [shape = 'u32[72,128]{1,0:T(1,128)}', space=vmem, size = 0x9000, scoped, tag = 'internal scratch']
  #allocation2 [shape = 'bf16[8,1024]{1,0:T(8,128)(2,1)}', space=vmem, size = 0x4000, scoped, tag = 'scratch operand']
  %s0 = inlined_call_operand.vmem [shape: bf16[8,32], index: 0, kind: input, shape index: {}]
  %s1 = inlined_call_operand.vmem [shape: bf16[32,512], index: 1, kind: input, shape index: {}]
  %s2 = inlined_call_operand.vmem [shape: f32[1,512], index: 2, kind: input, shape index: {}]
  %s3 = inlined_call_operand.hbm [shape: bf16[512,1024], index: 3, kind: input, shape index: {}]
  %s4 = inlined_call_operand.vmem [shape: f32[1,1024], index: 4, kind: input, shape index: {}]
  %s5 = inlined_call_operand.vmem [shape: bf16[1024,128], index: 5, kind: input, shape index: {}]
  %s6 = inlined_call_operand.vmem [shape: f32[1,128], index: 6, kind: input, shape index: {}]
  %s7 = inlined_call_operand.vmem [shape: f32[8,128], index: 7, kind: output, shape index: {}]
  %s8 = sld [smem:[#allocation0]]
  $region46: #{decoder_forward.1} parent=0
    _
  %s10 = ssub.s32 1, %s8
  %s11 = scalar_select 0, %s10, %s8
  $region1: #{decoder_forward.1} parent=0
    #allocation3 [shape = 'u8[1048576]{0}', space=vmem, size = 0x100000, scoped, tag = 'input window, operand 3, single buffered']
    #allocation4 [shape = 's32[1]{0}', space=sflag, size = 0x4, scoped, tag = 'scoped memory for decoder_forward.1']
    %12 = vsyncpa [#allocation4], 0
    // Predicated region
    $region2: #{decoder_forward.1} parent=1 // pred_check
      _
    $region3: #{decoder_forward.1} parent=1 // pred_check_branch
      %14 = sbr.rel (0) target = $region5
    $region4: #{decoder_forward.1} parent=1 // pred_region
      _
    $region5: #{decoder_forward.1} parent=1 // pred_fallthru
      _
    // Predicated region
    $region6: #{decoder_forward.1} parent=1 // pred_check
      _
    $region7: #{decoder_forward.1} parent=1 // pred_check_branch
      %16 = sbr.rel (0) target = $region9
    $region8: #{decoder_forward.1} parent=1 // pred_region
      _
    $region9: #{decoder_forward.1} parent=1 // pred_fallthru
      _
    // Predicated region
    $region10: #{decoder_forward.1} parent=1 // pred_check
      _
    $region11: #{decoder_forward.1} parent=1 // pred_check_branch
      %18 = sbr.rel (0) target = $region13
    $region12: #{decoder_forward.1} parent=1 // pred_region
      _
    $region13: #{decoder_forward.1} parent=1 // pred_fallthru
      _
    // Predicated region
    $region14: #{decoder_forward.1} parent=1 // pred_check
      _
    $region15: #{decoder_forward.1} parent=1 // pred_check_branch
      %20 = sbr.rel (0) target = $region17
    $region16: #{decoder_forward.1} parent=1 // pred_region
      %22 = vsyncadd [#allocation4], 0
      %s23 = sshll.u32 %s3, 4
      %s24 = int_to_ptr.hbm [resolvable:$true] %s23
      %s25 = sshll.u32 [#allocation3], 4
      %s26 = int_to_ptr.vmem [resolvable:$true] %s25
      %31 = dma.hbm_to_vmem [thread:$0]  %s24, 32768, %s26, [#allocation4], 512, 512, 32
    $region17: #{decoder_forward.1} parent=1 // pred_fallthru
      _
    // Predicated region
    $region18: #{decoder_forward.1} parent=1 // pred_check
      _
    $region19: #{decoder_forward.1} parent=1 // pred_check_branch
      %33 = sbr.rel (0) target = $region21
    $region20: #{decoder_forward.1} parent=1 // pred_region
      _
    $region21: #{decoder_forward.1} parent=1 // pred_fallthru
      _
    // Predicated region
    $region22: #{decoder_forward.1} parent=1 // pred_check
      _
    $region23: #{decoder_forward.1} parent=1 // pred_check_branch
      %35 = sbr.rel (0) target = $region25
    $region24: #{decoder_forward.1} parent=1 // pred_region
      _
    $region25: #{decoder_forward.1} parent=1 // pred_fallthru
      _
    // Predicated region
    $region26: #{decoder_forward.1} parent=1 // pred_check
      _
    $region27: #{decoder_forward.1} parent=1 // pred_check_branch
      %37 = sbr.rel (0) target = $region29
    $region28: #{decoder_forward.1} parent=1 // pred_region
      _
    $region29: #{decoder_forward.1} parent=1 // pred_fallthru
      _
    // Predicated region
    $region30: #{decoder_forward.1} parent=1 // pred_check
      _
    $region31: #{decoder_forward.1} parent=1 // pred_check_branch
      %39 = sbr.rel (0) target = $region33
    $region32: #{decoder_forward.1} parent=1 // pred_region
      %41 = dma.done [#allocation4], 32768
    $region33: #{decoder_forward.1} parent=1 // pred_fallthru
      _
    %p43 = scmp.eq.s32.totalorder 0, 0
    // Predicated region
    $region34: #{decoder_forward.1} parent=1 // pred_check
      %p44 = pneg %p43
    $region35: #{decoder_forward.1} parent=1 // pred_check_branch
      %46 = sbr.rel (%p44) target = $region37
    $region36: #{decoder_forward.1} parent=1 // pred_region
      %v47 = vld [vmem:[%s0] sm:$0xf]
      %v48 = vld [vmem:[%s1] sm:$0xff]
      %v49 = vld [vmem:[%s1 + $0x8] sm:$0xff]
      %v50 = vld [vmem:[%s1 + $0x10] sm:$0xff]
      %v51 = vld [vmem:[%s1 + $0x18] sm:$0xff]
      %v52 = vld [vmem:[%s1 + $0x20] sm:$0xff]
      %v53 = vld [vmem:[%s1 + $0x28] sm:$0xff]
      %v54 = vld [vmem:[%s1 + $0x30] sm:$0xff]
      %v55 = vld [vmem:[%s1 + $0x38] sm:$0xff]
      %v56 = vld [vmem:[%s2] sm:$0xf]
      %v58 = vperm.slane %v56, 0
      %v59 = vperm.slane %v56, 1
      %v60 = vperm.slane %v56, 2
      %v61 = vperm.slane %v56, 3
      %v74 = vunpack.c.l.b16 %v48
      %v75 = vunpack.c.h.b16 %v48
      %v76 = vunpack.c.l.b16 %v49
      %v77 = vunpack.c.h.b16 %v49
      %v78 = vunpack.c.l.b16 %v50
      %v79 = vunpack.c.h.b16 %v50
      %v80 = vunpack.c.l.b16 %v51
      %v81 = vunpack.c.h.b16 %v51
      %v82 = vunpack.c.l.b16 %v52
      %v83 = vunpack.c.h.b16 %v52
      %v84 = vunpack.c.l.b16 %v53
      %v85 = vunpack.c.h.b16 %v53
      %v86 = vunpack.c.l.b16 %v54
      %v87 = vunpack.c.h.b16 %v54
      %v88 = vunpack.c.l.b16 %v55
      %v89 = vunpack.c.h.b16 %v55
      %v90 = vpack.c.b16 %v78, %v74
      %v91 = vpack.c.b16 %v79, %v75
      %v92 = vpack.c.b16 %v80, %v76
      %v93 = vpack.c.b16 %v81, %v77
      %v94 = vpack.c.b16 %v86, %v82
      %v95 = vpack.c.b16 %v87, %v83
      %v96 = vpack.c.b16 %v88, %v84
      %v97 = vpack.c.b16 %v89, %v85
      %vm106 = vcmask 261120
      %v108 = vsel %vm106, %v47, 0
      %110 = vmatpush.bf16.msra.mxu0 0
      %111 = vmatpush.bf16.msra.mxu0 0
      %112 = vmatpush.bf16.msra.mxu0 0
      %113 = vmatpush.bf16.msra.mxu0 0
      %114 = vmatpush.bf16.msra.mxu0 0
      %115 = vmatpush.bf16.msra.mxu0 0
      %116 = vmatpush.bf16.msra.mxu0 %v94
      %117 = vmatpush.bf16.msra.mxu0 %v90
      %118 = vmatmul.bf16.gmra.mxu0 %v108
      %v119 = vpop.f32.mrf.mxu0
      %v120 = vadd.f32 %v58, %v119
      %v121 = vpop.f32.mrf.mxu0
      %122 = vdwg.mxu0
      %123 = vmatpush.bf16.msra.mxu0 0
      %124 = vmatpush.bf16.msra.mxu0 0
      %125 = vmatpush.bf16.msra.mxu0 0
      %126 = vmatpush.bf16.msra.mxu0 0
      %127 = vmatpush.bf16.msra.mxu0 0
      %128 = vmatpush.bf16.msra.mxu0 0
      %129 = vmatpush.bf16.msra.mxu0 %v95
      %130 = vmatpush.bf16.msra.mxu0 %v91
      %131 = vmatmul.bf16.gmra.mxu0 %v108
      %v132 = vpop.f32.mrf.mxu0
      %v133 = vadd.f32 %v59, %v132
      %v134 = vpop.f32.mrf.mxu0
      %135 = vdwg.mxu0
      %136 = vmatpush.bf16.msra.mxu0 0
      %137 = vmatpush.bf16.msra.mxu0 0
      %138 = vmatpush.bf16.msra.mxu0 0
      %139 = vmatpush.bf16.msra.mxu0 0
      %140 = vmatpush.bf16.msra.mxu0 0
      %141 = vmatpush.bf16.msra.mxu0 0
      %142 = vmatpush.bf16.msra.mxu0 %v96
      %143 = vmatpush.bf16.msra.mxu0 %v92
      %144 = vmatmul.bf16.gmra.mxu0 %v108
      %v145 = vpop.f32.mrf.mxu0
      %v146 = vadd.f32 %v60, %v145
      %v147 = vpop.f32.mrf.mxu0
      %148 = vdwg.mxu0
      %149 = vmatpush.bf16.msra.mxu0 0
      %150 = vmatpush.bf16.msra.mxu0 0
      %151 = vmatpush.bf16.msra.mxu0 0
      %152 = vmatpush.bf16.msra.mxu0 0
      %153 = vmatpush.bf16.msra.mxu0 0
      %154 = vmatpush.bf16.msra.mxu0 0
      %155 = vmatpush.bf16.msra.mxu0 %v97
      %156 = vmatpush.bf16.msra.mxu0 %v93
      %157 = vmatmul.bf16.gmra.mxu0 %v108
      %v158 = vpop.f32.mrf.mxu0
      %v159 = vadd.f32 %v61, %v158
      %v160 = vpop.f32.mrf.mxu0
      %161 = vdwg.mxu0
      %v162 = vmax.f32 %v120, 0.0
      %v163 = vmax.f32 %v133, 0.0
      %v164 = vmax.f32 %v146, 0.0
      %v165 = vmax.f32 %v159, 0.0
      %v166 = vpack.c.bf16 %v162, %v162
      %v167 = vpack.c.bf16 %v163, %v163
      %v168 = vpack.c.bf16 %v164, %v164
      %v169 = vpack.c.bf16 %v165, %v165
      %v170 = vld [vmem:[#allocation3] sm:$0xff]
      %v171 = vld [vmem:[#allocation3 + $0x8] sm:$0xff]
      %v172 = vld [vmem:[#allocation3 + $0x10] sm:$0xff]
      %v173 = vld [vmem:[#allocation3 + $0x18] sm:$0xff]
      %v174 = vld [vmem:[#allocation3 + $0x20] sm:$0xff]
      %v175 = vld [vmem:[#allocation3 + $0x28] sm:$0xff]
      %v176 = vld [vmem:[#allocation3 + $0x30] sm:$0xff]
      %v177 = vld [vmem:[#allocation3 + $0x38] sm:$0xff]
      %v178 = vld [vmem:[#allocation3 + $0x40] sm:$0xff]
      %v179 = vld [vmem:[#allocation3 + $0x48] sm:$0xff]
      %v180 = vld [vmem:[#allocation3 + $0x50] sm:$0xff]
      %v181 = vld [vmem:[#allocation3 + $0x58] sm:$0xff]
      %v182 = vld [vmem:[#allocation3 + $0x60] sm:$0xff]
      %v183 = vld [vmem:[#allocation3 + $0x68] sm:$0xff]
      %v184 = vld [vmem:[#allocation3 + $0x70] sm:$0xff]
      %v185 = vld [vmem:[#allocation3 + $0x78] sm:$0xff]
      %v186 = vld [vmem:[#allocation3 + $0x80] sm:$0xff]
      %v187 = vld [vmem:[#allocation3 + $0x88] sm:$0xff]
      %v188 = vld [vmem:[#allocation3 + $0x90] sm:$0xff]
      %v189 = vld [vmem:[#allocation3 + $0x98] sm:$0xff]
      %v190 = vld [vmem:[#allocation3 + $0xa0] sm:$0xff]
      %v191 = vld [vmem:[#allocation3 + $0xa8] sm:$0xff]
      %v192 = vld [vmem:[#allocation3 + $0xb0] sm:$0xff]
      %v193 = vld [vmem:[#allocation3 + $0xb8] sm:$0xff]
      %v194 = vld [vmem:[#allocation3 + $0xc0] sm:$0xff]
      %v195 = vld [vmem:[#allocation3 + $0xc8] sm:$0xff]
      %v196 = vld [vmem:[#allocation3 + $0xd0] sm:$0xff]
      %v197 = vld [vmem:[#allocation3 + $0xd8] sm:$0xff]
      %v198 = vld [vmem:[#allocation3 + $0xe0] sm:$0xff]
      %v199 = vld [vmem:[#allocation3 + $0xe8] sm:$0xff]
      %v200 = vld [vmem:[#allocation3 + $0xf0] sm:$0xff]
      %v201 = vld [vmem:[#allocation3 + $0xf8] sm:$0xff]
      %v202 = vld [vmem:[#allocation3 + $0x100] sm:$0xff]
      %v203 = vld [vmem:[#allocation3 + $0x108] sm:$0xff]
      %v204 = vld [vmem:[#allocation3 + $0x110] sm:$0xff]
      %v205 = vld [vmem:[#allocation3 + $0x118] sm:$0xff]
      %v206 = vld [vmem:[#allocation3 + $0x120] sm:$0xff]
      %v207 = vld [vmem:[#allocation3 + $0x128] sm:$0xff]
      %v208 = vld [vmem:[#allocation3 + $0x130] sm:$0xff]
      %v209 = vld [vmem:[#allocation3 + $0x138] sm:$0xff]
      %v210 = vld [vmem:[#allocation3 + $0x140] sm:$0xff]
      %v211 = vld [vmem:[#allocation3 + $0x148] sm:$0xff]
      %v212 = vld [vmem:[#allocation3 + $0x150] sm:$0xff]
      %v213 = vld [vmem:[#allocation3 + $0x158] sm:$0xff]
      %v214 = vld [vmem:[#allocation3 + $0x160] sm:$0xff]
      %v215 = vld [vmem:[#allocation3 + $0x168] sm:$0xff]
      %v216 = vld [vmem:[#allocation3 + $0x170] sm:$0xff]
      %v217 = vld [vmem:[#allocation3 + $0x178] sm:$0xff]
      %v218 = vld [vmem:[#allocation3 + $0x180] sm:$0xff]
      %v219 = vld [vmem:[#allocation3 + $0x188] sm:$0xff]
      %v220 = vld [vmem:[#allocation3 + $0x190] sm:$0xff]
      %v221 = vld [vmem:[#allocation3 + $0x198] sm:$0xff]
      %v222 = vld [vmem:[#allocation3 + $0x1a0] sm:$0xff]
      %v223 = vld [vmem:[#allocation3 + $0x1a8] sm:$0xff]
      %v224 = vld [vmem:[#allocation3 + $0x1b0] sm:$0xff]
      %v225 = vld [vmem:[#allocation3 + $0x1b8] sm:$0xff]
      %v226 = vld [vmem:[#allocation3 + $0x1c0] sm:$0xff]
      %v227 = vld [vmem:[#allocation3 + $0x1c8] sm:$0xff]
      %v228 = vld [vmem:[#allocation3 + $0x1d0] sm:$0xff]
      %v229 = vld [vmem:[#allocation3 + $0x1d8] sm:$0xff]
      %v230 = vld [vmem:[#allocation3 + $0x1e0] sm:$0xff]
      %v231 = vld [vmem:[#allocation3 + $0x1e8] sm:$0xff]
      %v232 = vld [vmem:[#allocation3 + $0x1f0] sm:$0xff]
      %v233 = vld [vmem:[#allocation3 + $0x1f8] sm:$0xff]
      %v234 = vld [vmem:[#allocation3 + $0x200] sm:$0xff]
      %v235 = vld [vmem:[#allocation3 + $0x208] sm:$0xff]
      %v236 = vld [vmem:[#allocation3 + $0x210] sm:$0xff]
      %v237 = vld [vmem:[#allocation3 + $0x218] sm:$0xff]
      %v238 = vld [vmem:[#allocation3 + $0x220] sm:$0xff]
      %v239 = vld [vmem:[#allocation3 + $0x228] sm:$0xff]
      %v240 = vld [vmem:[#allocation3 + $0x230] sm:$0xff]
      %v241 = vld [vmem:[#allocation3 + $0x238] sm:$0xff]
      %v242 = vld [vmem:[#allocation3 + $0x240] sm:$0xff]
      %v243 = vld [vmem:[#allocation3 + $0x248] sm:$0xff]
      %v244 = vld [vmem:[#allocation3 + $0x250] sm:$0xff]
      %v245 = vld [vmem:[#allocation3 + $0x258] sm:$0xff]
      %v246 = vld [vmem:[#allocation3 + $0x260] sm:$0xff]
      %v247 = vld [vmem:[#allocation3 + $0x268] sm:$0xff]
      %v248 = vld [vmem:[#allocation3 + $0x270] sm:$0xff]
      %v249 = vld [vmem:[#allocation3 + $0x278] sm:$0xff]
      %v250 = vld [vmem:[#allocation3 + $0x280] sm:$0xff]
      %v251 = vld [vmem:[#allocation3 + $0x288] sm:$0xff]
      %v252 = vld [vmem:[#allocation3 + $0x290] sm:$0xff]
      %v253 = vld [vmem:[#allocation3 + $0x298] sm:$0xff]
      %v254 = vld [vmem:[#allocation3 + $0x2a0] sm:$0xff]
      %v255 = vld [vmem:[#allocation3 + $0x2a8] sm:$0xff]
      %v256 = vld [vmem:[#allocation3 + $0x2b0] sm:$0xff]
      %v257 = vld [vmem:[#allocation3 + $0x2b8] sm:$0xff]
      %v258 = vld [vmem:[#allocation3 + $0x2c0] sm:$0xff]
      %v259 = vld [vmem:[#allocation3 + $0x2c8] sm:$0xff]
      %v260 = vld [vmem:[#allocation3 + $0x2d0] sm:$0xff]
      %v261 = vld [vmem:[#allocation3 + $0x2d8] sm:$0xff]
      %v262 = vld [vmem:[#allocation3 + $0x2e0] sm:$0xff]
      %v263 = vld [vmem:[#allocation3 + $0x2e8] sm:$0xff]
      %v264 = vld [vmem:[#allocation3 + $0x2f0] sm:$0xff]
      %v265 = vld [vmem:[#allocation3 + $0x2f8] sm:$0xff]
      %v266 = vld [vmem:[#allocation3 + $0x300] sm:$0xff]
      %v267 = vld [vmem:[#allocation3 + $0x308] sm:$0xff]
      %v268 = vld [vmem:[#allocation3 + $0x310] sm:$0xff]
      %v269 = vld [vmem:[#allocation3 + $0x318] sm:$0xff]
      %v270 = vld [vmem:[#allocation3 + $0x320] sm:$0xff]
      %v271 = vld [vmem:[#allocation3 + $0x328] sm:$0xff]
      %v272 = vld [vmem:[#allocation3 + $0x330] sm:$0xff]
      %v273 = vld [vmem:[#allocation3 + $0x338] sm:$0xff]
      %v274 = vld [vmem:[#allocation3 + $0x340] sm:$0xff]
      %v275 = vld [vmem:[#allocation3 + $0x348] sm:$0xff]
      %v276 = vld [vmem:[#allocation3 + $0x350] sm:$0xff]
      %v277 = vld [vmem:[#allocation3 + $0x358] sm:$0xff]
      %v278 = vld [vmem:[#allocation3 + $0x360] sm:$0xff]
      %v279 = vld [vmem:[#allocation3 + $0x368] sm:$0xff]
      %v280 = vld [vmem:[#allocation3 + $0x370] sm:$0xff]
      %v281 = vld [vmem:[#allocation3 + $0x378] sm:$0xff]
      %v282 = vld [vmem:[#allocation3 + $0x380] sm:$0xff]
      %v283 = vld [vmem:[#allocation3 + $0x388] sm:$0xff]
      %v284 = vld [vmem:[#allocation3 + $0x390] sm:$0xff]
      %v285 = vld [vmem:[#allocation3 + $0x398] sm:$0xff]
      %v286 = vld [vmem:[#allocation3 + $0x3a0] sm:$0xff]
      %v287 = vld [vmem:[#allocation3 + $0x3a8] sm:$0xff]
      %v288 = vld [vmem:[#allocation3 + $0x3b0] sm:$0xff]
      %v289 = vld [vmem:[#allocation3 + $0x3b8] sm:$0xff]
      %v290 = vld [vmem:[#allocation3 + $0x3c0] sm:$0xff]
      %v291 = vld [vmem:[#allocation3 + $0x3c8] sm:$0xff]
      %v292 = vld [vmem:[#allocation3 + $0x3d0] sm:$0xff]
      %v293 = vld [vmem:[#allocation3 + $0x3d8] sm:$0xff]
      %v294 = vld [vmem:[#allocation3 + $0x3e0] sm:$0xff]
      %v295 = vld [vmem:[#allocation3 + $0x3e8] sm:$0xff]
      %v296 = vld [vmem:[#allocation3 + $0x3f0] sm:$0xff]
      %v297 = vld [vmem:[#allocation3 + $0x3f8] sm:$0xff]
      %v298 = vld [vmem:[#allocation3 + $0x400] sm:$0xff]
      %v299 = vld [vmem:[#allocation3 + $0x408] sm:$0xff]
      %v300 = vld [vmem:[#allocation3 + $0x410] sm:$0xff]
      %v301 = vld [vmem:[#allocation3 + $0x418] sm:$0xff]
      %v302 = vld [vmem:[#allocation3 + $0x420] sm:$0xff]
      %v303 = vld [vmem:[#allocation3 + $0x428] sm:$0xff]
      %v304 = vld [vmem:[#allocation3 + $0x430] sm:$0xff]
      %v305 = vld [vmem:[#allocation3 + $0x438] sm:$0xff]
      %v306 = vld [vmem:[#allocation3 + $0x440] sm:$0xff]
      %v307 = vld [vmem:[#allocation3 + $0x448] sm:$0xff]
      %v308 = vld [vmem:[#allocation3 + $0x450] sm:$0xff]
      %v309 = vld [vmem:[#allocation3 + $0x458] sm:$0xff]
      %v310 = vld [vmem:[#allocation3 + $0x460] sm:$0xff]
      %v311 = vld [vmem:[#allocation3 + $0x468] sm:$0xff]
      %v312 = vld [vmem:[#allocation3 + $0x470] sm:$0xff]
      %v313 = vld [vmem:[#allocation3 + $0x478] sm:$0xff]
      %v314 = vld [vmem:[#allocation3 + $0x480] sm:$0xff]
      %v315 = vld [vmem:[#allocation3 + $0x488] sm:$0xff]
      %v316 = vld [vmem:[#allocation3 + $0x490] sm:$0xff]
      %v317 = vld [vmem:[#allocation3 + $0x498] sm:$0xff]
      %v318 = vld [vmem:[#allocation3 + $0x4a0] sm:$0xff]
      %v319 = vld [vmem:[#allocation3 + $0x4a8] sm:$0xff]
      %v320 = vld [vmem:[#allocation3 + $0x4b0] sm:$0xff]
      %v321 = vld [vmem:[#allocation3 + $0x4b8] sm:$0xff]
      %v322 = vld [vmem:[#allocation3 + $0x4c0] sm:$0xff]
      %v323 = vld [vmem:[#allocation3 + $0x4c8] sm:$0xff]
      %v324 = vld [vmem:[#allocation3 + $0x4d0] sm:$0xff]
      %v325 = vld [vmem:[#allocation3 + $0x4d8] sm:$0xff]
      %v326 = vld [vmem:[#allocation3 + $0x4e0] sm:$0xff]
      %v327 = vld [vmem:[#allocation3 + $0x4e8] sm:$0xff]
      %v328 = vld [vmem:[#allocation3 + $0x4f0] sm:$0xff]
      %v329 = vld [vmem:[#allocation3 + $0x4f8] sm:$0xff]
      %v330 = vld [vmem:[#allocation3 + $0x500] sm:$0xff]
      %v331 = vld [vmem:[#allocation3 + $0x508] sm:$0xff]
      %v332 = vld [vmem:[#allocation3 + $0x510] sm:$0xff]
      %v333 = vld [vmem:[#allocation3 + $0x518] sm:$0xff]
      %v334 = vld [vmem:[#allocation3 + $0x520] sm:$0xff]
      %v335 = vld [vmem:[#allocation3 + $0x528] sm:$0xff]
      %v336 = vld [vmem:[#allocation3 + $0x530] sm:$0xff]
      %v337 = vld [vmem:[#allocation3 + $0x538] sm:$0xff]
      %v338 = vld [vmem:[#allocation3 + $0x540] sm:$0xff]
      %v339 = vld [vmem:[#allocation3 + $0x548] sm:$0xff]
      %v340 = vld [vmem:[#allocation3 + $0x550] sm:$0xff]
      %v341 = vld [vmem:[#allocation3 + $0x558] sm:$0xff]
      %v342 = vld [vmem:[#allocation3 + $0x560] sm:$0xff]
      %v343 = vld [vmem:[#allocation3 + $0x568] sm:$0xff]
      %v344 = vld [vmem:[#allocation3 + $0x570] sm:$0xff]
      %v345 = vld [vmem:[#allocation3 + $0x578] sm:$0xff]
      %v346 = vld [vmem:[#allocation3 + $0x580] sm:$0xff]
      %v347 = vld [vmem:[#allocation3 + $0x588] sm:$0xff]
      %v348 = vld [vmem:[#allocation3 + $0x590] sm:$0xff]
      %v349 = vld [vmem:[#allocation3 + $0x598] sm:$0xff]
      %v350 = vld [vmem:[#allocation3 + $0x5a0] sm:$0xff]
      %v351 = vld [vmem:[#allocation3 + $0x5a8] sm:$0xff]
      %v352 = vld [vmem:[#allocation3 + $0x5b0] sm:$0xff]
      %v353 = vld [vmem:[#allocation3 + $0x5b8] sm:$0xff]
      %v354 = vld [vmem:[#allocation3 + $0x5c0] sm:$0xff]
      %v355 = vld [vmem:[#allocation3 + $0x5c8] sm:$0xff]
      %v356 = vld [vmem:[#allocation3 + $0x5d0] sm:$0xff]
      %v357 = vld [vmem:[#allocation3 + $0x5d8] sm:$0xff]
      %v358 = vld [vmem:[#allocation3 + $0x5e0] sm:$0xff]
      %v359 = vld [vmem:[#allocation3 + $0x5e8] sm:$0xff]
      %v360 = vld [vmem:[#allocation3 + $0x5f0] sm:$0xff]
      %v361 = vld [vmem:[#allocation3 + $0x5f8] sm:$0xff]
      %v362 = vld [vmem:[#allocation3 + $0x600] sm:$0xff]
      %v363 = vld [vmem:[#allocation3 + $0x608] sm:$0xff]
      %v364 = vld [vmem:[#allocation3 + $0x610] sm:$0xff]
      %v365 = vld [vmem:[#allocation3 + $0x618] sm:$0xff]
      %v366 = vld [vmem:[#allocation3 + $0x620] sm:$0xff]
      %v367 = vld [vmem:[#allocation3 + $0x628] sm:$0xff]
      %v368 = vld [vmem:[#allocation3 + $0x630] sm:$0xff]
      %v369 = vld [vmem:[#allocation3 + $0x638] sm:$0xff]
      %v370 = vld [vmem:[#allocation3 + $0x640] sm:$0xff]
      %v371 = vld [vmem:[#allocation3 + $0x648] sm:$0xff]
      %v372 = vld [vmem:[#allocation3 + $0x650] sm:$0xff]
      %v373 = vld [vmem:[#allocation3 + $0x658] sm:$0xff]
      %v374 = vld [vmem:[#allocation3 + $0x660] sm:$0xff]
      %v375 = vld [vmem:[#allocation3 + $0x668] sm:$0xff]
      %v376 = vld [vmem:[#allocation3 + $0x670] sm:$0xff]
      %v377 = vld [vmem:[#allocation3 + $0x678] sm:$0xff]
      %v378 = vld [vmem:[#allocation3 + $0x680] sm:$0xff]
      %v379 = vld [vmem:[#allocation3 + $0x688] sm:$0xff]
      %v380 = vld [vmem:[#allocation3 + $0x690] sm:$0xff]
      %v381 = vld [vmem:[#allocation3 + $0x698] sm:$0xff]
      %v382 = vld [vmem:[#allocation3 + $0x6a0] sm:$0xff]
      %v383 = vld [vmem:[#allocation3 + $0x6a8] sm:$0xff]
      %v384 = vld [vmem:[#allocation3 + $0x6b0] sm:$0xff]
      %v385 = vld [vmem:[#allocation3 + $0x6b8] sm:$0xff]
      %v386 = vld [vmem:[#allocation3 + $0x6c0] sm:$0xff]
      %v387 = vld [vmem:[#allocation3 + $0x6c8] sm:$0xff]
      %v388 = vld [vmem:[#allocation3 + $0x6d0] sm:$0xff]
      %v389 = vld [vmem:[#allocation3 + $0x6d8] sm:$0xff]
      %v390 = vld [vmem:[#allocation3 + $0x6e0] sm:$0xff]
      %v391 = vld [vmem:[#allocation3 + $0x6e8] sm:$0xff]
      %v392 = vld [vmem:[#allocation3 + $0x6f0] sm:$0xff]
      %v393 = vld [vmem:[#allocation3 + $0x6f8] sm:$0xff]
      %v394 = vld [vmem:[#allocation3 + $0x700] sm:$0xff]
      %v395 = vld [vmem:[#allocation3 + $0x708] sm:$0xff]
      %v396 = vld [vmem:[#allocation3 + $0x710] sm:$0xff]
      %v397 = vld [vmem:[#allocation3 + $0x718] sm:$0xff]
      %v398 = vld [vmem:[#allocation3 + $0x720] sm:$0xff]
      %v399 = vld [vmem:[#allocation3 + $0x728] sm:$0xff]
      %v400 = vld [vmem:[#allocation3 + $0x730] sm:$0xff]
      %v401 = vld [vmem:[#allocation3 + $0x738] sm:$0xff]
      %v402 = vld [vmem:[#allocation3 + $0x740] sm:$0xff]
      %v403 = vld [vmem:[#allocation3 + $0x748] sm:$0xff]
      %v404 = vld [vmem:[#allocation3 + $0x750] sm:$0xff]
      %v405 = vld [vmem:[#allocation3 + $0x758] sm:$0xff]
      %v406 = vld [vmem:[#allocation3 + $0x760] sm:$0xff]
      %v407 = vld [vmem:[#allocation3 + $0x768] sm:$0xff]
      %v408 = vld [vmem:[#allocation3 + $0x770] sm:$0xff]
      %v409 = vld [vmem:[#allocation3 + $0x778] sm:$0xff]
      %v410 = vld [vmem:[#allocation3 + $0x780] sm:$0xff]
      %v411 = vld [vmem:[#allocation3 + $0x788] sm:$0xff]
      %v412 = vld [vmem:[#allocation3 + $0x790] sm:$0xff]
      %v413 = vld [vmem:[#allocation3 + $0x798] sm:$0xff]
      %v414 = vld [vmem:[#allocation3 + $0x7a0] sm:$0xff]
      %v415 = vld [vmem:[#allocation3 + $0x7a8] sm:$0xff]
      %v416 = vld [vmem:[#allocation3 + $0x7b0] sm:$0xff]
      %v417 = vld [vmem:[#allocation3 + $0x7b8] sm:$0xff]
      %v418 = vld [vmem:[#allocation3 + $0x7c0] sm:$0xff]
      %v419 = vld [vmem:[#allocation3 + $0x7c8] sm:$0xff]
      %v420 = vld [vmem:[#allocation3 + $0x7d0] sm:$0xff]
      %v421 = vld [vmem:[#allocation3 + $0x7d8] sm:$0xff]
      %v422 = vld [vmem:[#allocation3 + $0x7e0] sm:$0xff]
      %v423 = vld [vmem:[#allocation3 + $0x7e8] sm:$0xff]
      %v424 = vld [vmem:[#allocation3 + $0x7f0] sm:$0xff]
      %v425 = vld [vmem:[#allocation3 + $0x7f8] sm:$0xff]
      %v426 = vld [vmem:[%s4] sm:$0xff]
      %v428 = vperm.slane %v426, 0
      %v429 = vperm.slane %v426, 1
      %v430 = vperm.slane %v426, 2
      %v431 = vperm.slane %v426, 3
      %v432 = vperm.slane %v426, 4
      %v433 = vperm.slane %v426, 5
      %v434 = vperm.slane %v426, 6
      %v435 = vperm.slane %v426, 7
      %v700 = vunpack.c.l.b16 %v170
      %v701 = vunpack.c.h.b16 %v170
      %v702 = vunpack.c.l.b16 %v171
      %v703 = vunpack.c.h.b16 %v171
      %v704 = vunpack.c.l.b16 %v172
      %v705 = vunpack.c.h.b16 %v172
      %v706 = vunpack.c.l.b16 %v173
      %v707 = vunpack.c.h.b16 %v173
      %v708 = vunpack.c.l.b16 %v174
      %v709 = vunpack.c.h.b16 %v174
      %v710 = vunpack.c.l.b16 %v175
      %v711 = vunpack.c.h.b16 %v175
      %v712 = vunpack.c.l.b16 %v176
      %v713 = vunpack.c.h.b16 %v176
      %v714 = vunpack.c.l.b16 %v177
      %v715 = vunpack.c.h.b16 %v177
      %v716 = vunpack.c.l.b16 %v178
      %v717 = vunpack.c.h.b16 %v178
      %v718 = vunpack.c.l.b16 %v179
      %v719 = vunpack.c.h.b16 %v179
      %v720 = vunpack.c.l.b16 %v180
      %v721 = vunpack.c.h.b16 %v180
      %v722 = vunpack.c.l.b16 %v181
      %v723 = vunpack.c.h.b16 %v181
      %v724 = vunpack.c.l.b16 %v182
      %v725 = vunpack.c.h.b16 %v182
      %v726 = vunpack.c.l.b16 %v183
      %v727 = vunpack.c.h.b16 %v183
      %v728 = vunpack.c.l.b16 %v184
      %v729 = vunpack.c.h.b16 %v184
      %v730 = vunpack.c.l.b16 %v185
      %v731 = vunpack.c.h.b16 %v185
      %v732 = vunpack.c.l.b16 %v186
      %v733 = vunpack.c.h.b16 %v186
      %v734 = vunpack.c.l.b16 %v187
      %v735 = vunpack.c.h.b16 %v187
      %v736 = vunpack.c.l.b16 %v188
      %v737 = vunpack.c.h.b16 %v188
      %v738 = vunpack.c.l.b16 %v189
      %v739 = vunpack.c.h.b16 %v189
      %v740 = vunpack.c.l.b16 %v190
      %v741 = vunpack.c.h.b16 %v190
      %v742 = vunpack.c.l.b16 %v191
      %v743 = vunpack.c.h.b16 %v191
      %v744 = vunpack.c.l.b16 %v192
      %v745 = vunpack.c.h.b16 %v192
      %v746 = vunpack.c.l.b16 %v193
      %v747 = vunpack.c.h.b16 %v193
      %v748 = vunpack.c.l.b16 %v194
      %v749 = vunpack.c.h.b16 %v194
      %v750 = vunpack.c.l.b16 %v195
      %v751 = vunpack.c.h.b16 %v195
      %v752 = vunpack.c.l.b16 %v196
      %v753 = vunpack.c.h.b16 %v196
      %v754 = vunpack.c.l.b16 %v197
      %v755 = vunpack.c.h.b16 %v197
      %v756 = vunpack.c.l.b16 %v198
      %v757 = vunpack.c.h.b16 %v198
      %v758 = vunpack.c.l.b16 %v199
      %v759 = vunpack.c.h.b16 %v199
      %v760 = vunpack.c.l.b16 %v200
      %v761 = vunpack.c.h.b16 %v200
      %v762 = vunpack.c.l.b16 %v201
      %v763 = vunpack.c.h.b16 %v201
      %v764 = vunpack.c.l.b16 %v202
      %v765 = vunpack.c.h.b16 %v202
      %v766 = vunpack.c.l.b16 %v203
      %v767 = vunpack.c.h.b16 %v203
      %v768 = vunpack.c.l.b16 %v204
      %v769 = vunpack.c.h.b16 %v204
      %v770 = vunpack.c.l.b16 %v205
      %v771 = vunpack.c.h.b16 %v205
      %v772 = vunpack.c.l.b16 %v206
      %v773 = vunpack.c.h.b16 %v206
      %v774 = vunpack.c.l.b16 %v207
      %v775 = vunpack.c.h.b16 %v207
      %v776 = vunpack.c.l.b16 %v208
      %v777 = vunpack.c.h.b16 %v208
      %v778 = vunpack.c.l.b16 %v209
      %v779 = vunpack.c.h.b16 %v209
      %v780 = vunpack.c.l.b16 %v210
      %v781 = vunpack.c.h.b16 %v210
      %v782 = vunpack.c.l.b16 %v211
      %v783 = vunpack.c.h.b16 %v211
      %v784 = vunpack.c.l.b16 %v212
      %v785 = vunpack.c.h.b16 %v212
      %v786 = vunpack.c.l.b16 %v213
      %v787 = vunpack.c.h.b16 %v213
      %v788 = vunpack.c.l.b16 %v214
      %v789 = vunpack.c.h.b16 %v214
      %v790 = vunpack.c.l.b16 %v215
      %v791 = vunpack.c.h.b16 %v215
      %v792 = vunpack.c.l.b16 %v216
      %v793 = vunpack.c.h.b16 %v216
      %v794 = vunpack.c.l.b16 %v217
      %v795 = vunpack.c.h.b16 %v217
      %v796 = vunpack.c.l.b16 %v218
      %v797 = vunpack.c.h.b16 %v218
      %v798 = vunpack.c.l.b16 %v219
      %v799 = vunpack.c.h.b16 %v219
      %v800 = vunpack.c.l.b16 %v220
      %v801 = vunpack.c.h.b16 %v220
      %v802 = vunpack.c.l.b16 %v221
      %v803 = vunpack.c.h.b16 %v221
      %v804 = vunpack.c.l.b16 %v222
      %v805 = vunpack.c.h.b16 %v222
      %v806 = vunpack.c.l.b16 %v223
      %v807 = vunpack.c.h.b16 %v223
      %v808 = vunpack.c.l.b16 %v224
      %v809 = vunpack.c.h.b16 %v224
      %v810 = vunpack.c.l.b16 %v225
      %v811 = vunpack.c.h.b16 %v225
      %v812 = vunpack.c.l.b16 %v226
      %v813 = vunpack.c.h.b16 %v226
      %v814 = vunpack.c.l.b16 %v227
      %v815 = vunpack.c.h.b16 %v227
      %v816 = vunpack.c.l.b16 %v228
      %v817 = vunpack.c.h.b16 %v228
      %v818 = vunpack.c.l.b16 %v229
      %v819 = vunpack.c.h.b16 %v229
      %v820 = vunpack.c.l.b16 %v230
      %v821 = vunpack.c.h.b16 %v230
      %v822 = vunpack.c.l.b16 %v231
      %v823 = vunpack.c.h.b16 %v231
      %v824 = vunpack.c.l.b16 %v232
      %v825 = vunpack.c.h.b16 %v232
      %v826 = vunpack.c.l.b16 %v233
      %v827 = vunpack.c.h.b16 %v233
      %v828 = vunpack.c.l.b16 %v234
      %v829 = vunpack.c.h.b16 %v234
      %v830 = vunpack.c.l.b16 %v235
      %v831 = vunpack.c.h.b16 %v235
      %v832 = vunpack.c.l.b16 %v236
      %v833 = vunpack.c.h.b16 %v236
      %v834 = vunpack.c.l.b16 %v237
      %v835 = vunpack.c.h.b16 %v237
      %v836 = vunpack.c.l.b16 %v238
      %v837 = vunpack.c.h.b16 %v238
      %v838 = vunpack.c.l.b16 %v239
      %v839 = vunpack.c.h.b16 %v239
      %v840 = vunpack.c.l.b16 %v240
      %v841 = vunpack.c.h.b16 %v240
      %v842 = vunpack.c.l.b16 %v241
      %v843 = vunpack.c.h.b16 %v241
      %v844 = vunpack.c.l.b16 %v242
      %v845 = vunpack.c.h.b16 %v242
      %v846 = vunpack.c.l.b16 %v243
      %v847 = vunpack.c.h.b16 %v243
      %v848 = vunpack.c.l.b16 %v244
      %v849 = vunpack.c.h.b16 %v244
      %v850 = vunpack.c.l.b16 %v245
      %v851 = vunpack.c.h.b16 %v245
      %v852 = vunpack.c.l.b16 %v246
      %v853 = vunpack.c.h.b16 %v246
      %v854 = vunpack.c.l.b16 %v247
      %v855 = vunpack.c.h.b16 %v247
      %v856 = vunpack.c.l.b16 %v248
      %v857 = vunpack.c.h.b16 %v248
      %v858 = vunpack.c.l.b16 %v249
      %v859 = vunpack.c.h.b16 %v249
      %v860 = vunpack.c.l.b16 %v250
      %v861 = vunpack.c.h.b16 %v250
      %v862 = vunpack.c.l.b16 %v251
      %v863 = vunpack.c.h.b16 %v251
      %v864 = vunpack.c.l.b16 %v252
      %v865 = vunpack.c.h.b16 %v252
      %v866 = vunpack.c.l.b16 %v253
      %v867 = vunpack.c.h.b16 %v253
      %v868 = vunpack.c.l.b16 %v254
      %v869 = vunpack.c.h.b16 %v254
      %v870 = vunpack.c.l.b16 %v255
      %v871 = vunpack.c.h.b16 %v255
      %v872 = vunpack.c.l.b16 %v256
      %v873 = vunpack.c.h.b16 %v256
      %v874 = vunpack.c.l.b16 %v257
      %v875 = vunpack.c.h.b16 %v257
      %v876 = vunpack.c.l.b16 %v258
      %v877 = vunpack.c.h.b16 %v258
      %v878 = vunpack.c.l.b16 %v259
      %v879 = vunpack.c.h.b16 %v259
      %v880 = vunpack.c.l.b16 %v260
      %v881 = vunpack.c.h.b16 %v260
      %v882 = vunpack.c.l.b16 %v261
      %v883 = vunpack.c.h.b16 %v261
      %v884 = vunpack.c.l.b16 %v262
      %v885 = vunpack.c.h.b16 %v262
      %v886 = vunpack.c.l.b16 %v263
      %v887 = vunpack.c.h.b16 %v263
      %v888 = vunpack.c.l.b16 %v264
      %v889 = vunpack.c.h.b16 %v264
      %v890 = vunpack.c.l.b16 %v265
      %v891 = vunpack.c.h.b16 %v265
      %v892 = vunpack.c.l.b16 %v266
      %v893 = vunpack.c.h.b16 %v266
      %v894 = vunpack.c.l.b16 %v267
      %v895 = vunpack.c.h.b16 %v267
      %v896 = vunpack.c.l.b16 %v268
      %v897 = vunpack.c.h.b16 %v268
      %v898 = vunpack.c.l.b16 %v269
      %v899 = vunpack.c.h.b16 %v269
      %v900 = vunpack.c.l.b16 %v270
      %v901 = vunpack.c.h.b16 %v270
      %v902 = vunpack.c.l.b16 %v271
      %v903 = vunpack.c.h.b16 %v271
      %v904 = vunpack.c.l.b16 %v272
      %v905 = vunpack.c.h.b16 %v272
      %v906 = vunpack.c.l.b16 %v273
      %v907 = vunpack.c.h.b16 %v273
      %v908 = vunpack.c.l.b16 %v274
      %v909 = vunpack.c.h.b16 %v274
      %v910 = vunpack.c.l.b16 %v275
      %v911 = vunpack.c.h.b16 %v275
      %v912 = vunpack.c.l.b16 %v276
      %v913 = vunpack.c.h.b16 %v276
      %v914 = vunpack.c.l.b16 %v277
      %v915 = vunpack.c.h.b16 %v277
      %v916 = vunpack.c.l.b16 %v278
      %v917 = vunpack.c.h.b16 %v278
      %v918 = vunpack.c.l.b16 %v279
      %v919 = vunpack.c.h.b16 %v279
      %v920 = vunpack.c.l.b16 %v280
      %v921 = vunpack.c.h.b16 %v280
      %v922 = vunpack.c.l.b16 %v281
      %v923 = vunpack.c.h.b16 %v281
      %v924 = vunpack.c.l.b16 %v282
      %v925 = vunpack.c.h.b16 %v282
      %v926 = vunpack.c.l.b16 %v283
      %v927 = vunpack.c.h.b16 %v283
      %v928 = vunpack.c.l.b16 %v284
      %v929 = vunpack.c.h.b16 %v284
      %v930 = vunpack.c.l.b16 %v285
      %v931 = vunpack.c.h.b16 %v285
      %v932 = vunpack.c.l.b16 %v286
      %v933 = vunpack.c.h.b16 %v286
      %v934 = vunpack.c.l.b16 %v287
      %v935 = vunpack.c.h.b16 %v287
      %v936 = vunpack.c.l.b16 %v288
      %v937 = vunpack.c.h.b16 %v288
      %v938 = vunpack.c.l.b16 %v289
      %v939 = vunpack.c.h.b16 %v289
      %v940 = vunpack.c.l.b16 %v290
      %v941 = vunpack.c.h.b16 %v290
      %v942 = vunpack.c.l.b16 %v291
      %v943 = vunpack.c.h.b16 %v291
      %v944 = vunpack.c.l.b16 %v292
      %v945 = vunpack.c.h.b16 %v292
      %v946 = vunpack.c.l.b16 %v293
      %v947 = vunpack.c.h.b16 %v293
      %v948 = vunpack.c.l.b16 %v294
      %v949 = vunpack.c.h.b16 %v294
      %v950 = vunpack.c.l.b16 %v295
      %v951 = vunpack.c.h.b16 %v295
      %v952 = vunpack.c.l.b16 %v296
      %v953 = vunpack.c.h.b16 %v296
      %v954 = vunpack.c.l.b16 %v297
      %v955 = vunpack.c.h.b16 %v297
      %v956 = vunpack.c.l.b16 %v298
      %v957 = vunpack.c.h.b16 %v298
      %v958 = vunpack.c.l.b16 %v299
      %v959 = vunpack.c.h.b16 %v299
      %v960 = vunpack.c.l.b16 %v300
      %v961 = vunpack.c.h.b16 %v300
      %v962 = vunpack.c.l.b16 %v301
      %v963 = vunpack.c.h.b16 %v301
      %v964 = vunpack.c.l.b16 %v302
      %v965 = vunpack.c.h.b16 %v302
      %v966 = vunpack.c.l.b16 %v303
      %v967 = vunpack.c.h.b16 %v303
      %v968 = vunpack.c.l.b16 %v304
      %v969 = vunpack.c.h.b16 %v304
      %v970 = vunpack.c.l.b16 %v305
      %v971 = vunpack.c.h.b16 %v305
      %v972 = vunpack.c.l.b16 %v306
      %v973 = vunpack.c.h.b16 %v306
      %v974 = vunpack.c.l.b16 %v307
      %v975 = vunpack.c.h.b16 %v307
      %v976 = vunpack.c.l.b16 %v308
      %v977 = vunpack.c.h.b16 %v308
      %v978 = vunpack.c.l.b16 %v309
      %v979 = vunpack.c.h.b16 %v309
      %v980 = vunpack.c.l.b16 %v310
      %v981 = vunpack.c.h.b16 %v310
      %v982 = vunpack.c.l.b16 %v311
      %v983 = vunpack.c.h.b16 %v311
      %v984 = vunpack.c.l.b16 %v312
      %v985 = vunpack.c.h.b16 %v312
      %v986 = vunpack.c.l.b16 %v313
      %v987 = vunpack.c.h.b16 %v313
      %v988 = vunpack.c.l.b16 %v314
      %v989 = vunpack.c.h.b16 %v314
      %v990 = vunpack.c.l.b16 %v315
      %v991 = vunpack.c.h.b16 %v315
      %v992 = vunpack.c.l.b16 %v316
      %v993 = vunpack.c.h.b16 %v316
      %v994 = vunpack.c.l.b16 %v317
      %v995 = vunpack.c.h.b16 %v317
      %v996 = vunpack.c.l.b16 %v318
      %v997 = vunpack.c.h.b16 %v318
      %v998 = vunpack.c.l.b16 %v319
      %v999 = vunpack.c.h.b16 %v319
      %v1000 = vunpack.c.l.b16 %v320
      %v1001 = vunpack.c.h.b16 %v320
      %v1002 = vunpack.c.l.b16 %v321
      %v1003 = vunpack.c.h.b16 %v321
      %v1004 = vunpack.c.l.b16 %v322
      %v1005 = vunpack.c.h.b16 %v322
      %v1006 = vunpack.c.l.b16 %v323
      %v1007 = vunpack.c.h.b16 %v323
      %v1008 = vunpack.c.l.b16 %v324
      %v1009 = vunpack.c.h.b16 %v324
      %v1010 = vunpack.c.l.b16 %v325
      %v1011 = vunpack.c.h.b16 %v325
      %v1012 = vunpack.c.l.b16 %v326
      %v1013 = vunpack.c.h.b16 %v326
      %v1014 = vunpack.c.l.b16 %v327
      %v1015 = vunpack.c.h.b16 %v327
      %v1016 = vunpack.c.l.b16 %v328
      %v1017 = vunpack.c.h.b16 %v328
      %v1018 = vunpack.c.l.b16 %v329
      %v1019 = vunpack.c.h.b16 %v329
      %v1020 = vunpack.c.l.b16 %v330
      %v1021 = vunpack.c.h.b16 %v330
      %v1022 = vunpack.c.l.b16 %v331
      %v1023 = vunpack.c.h.b16 %v331
      %v1024 = vunpack.c.l.b16 %v332
      %v1025 = vunpack.c.h.b16 %v332
      %v1026 = vunpack.c.l.b16 %v333
      %v1027 = vunpack.c.h.b16 %v333
      %v1028 = vunpack.c.l.b16 %v334
      %v1029 = vunpack.c.h.b16 %v334
      %v1030 = vunpack.c.l.b16 %v335
      %v1031 = vunpack.c.h.b16 %v335
      %v1032 = vunpack.c.l.b16 %v336
      %v1033 = vunpack.c.h.b16 %v336
      %v1034 = vunpack.c.l.b16 %v337
      %v1035 = vunpack.c.h.b16 %v337
      %v1036 = vunpack.c.l.b16 %v338
      %v1037 = vunpack.c.h.b16 %v338
      %v1038 = vunpack.c.l.b16 %v339
      %v1039 = vunpack.c.h.b16 %v339
      %v1040 = vunpack.c.l.b16 %v340
      %v1041 = vunpack.c.h.b16 %v340
      %v1042 = vunpack.c.l.b16 %v341
      %v1043 = vunpack.c.h.b16 %v341
      %v1044 = vunpack.c.l.b16 %v342
      %v1045 = vunpack.c.h.b16 %v342
      %v1046 = vunpack.c.l.b16 %v343
      %v1047 = vunpack.c.h.b16 %v343
      %v1048 = vunpack.c.l.b16 %v344
      %v1049 = vunpack.c.h.b16 %v344
      %v1050 = vunpack.c.l.b16 %v345
      %v1051 = vunpack.c.h.b16 %v345
      %v1052 = vunpack.c.l.b16 %v346
      %v1053 = vunpack.c.h.b16 %v346
      %v1054 = vunpack.c.l.b16 %v347
      %v1055 = vunpack.c.h.b16 %v347
      %v1056 = vunpack.c.l.b16 %v348
      %v1057 = vunpack.c.h.b16 %v348
      %v1058 = vunpack.c.l.b16 %v349
      %v1059 = vunpack.c.h.b16 %v349
      %v1060 = vunpack.c.l.b16 %v350
      %v1061 = vunpack.c.h.b16 %v350
      %v1062 = vunpack.c.l.b16 %v351
      %v1063 = vunpack.c.h.b16 %v351
      %v1064 = vunpack.c.l.b16 %v352
      %v1065 = vunpack.c.h.b16 %v352
      %v1066 = vunpack.c.l.b16 %v353
      %v1067 = vunpack.c.h.b16 %v353
      %v1068 = vunpack.c.l.b16 %v354
      %v1069 = vunpack.c.h.b16 %v354
      %v1070 = vunpack.c.l.b16 %v355
      %v1071 = vunpack.c.h.b16 %v355
      %v1072 = vunpack.c.l.b16 %v356
      %v1073 = vunpack.c.h.b16 %v356
      %v1074 = vunpack.c.l.b16 %v357
      %v1075 = vunpack.c.h.b16 %v357
      %v1076 = vunpack.c.l.b16 %v358
      %v1077 = vunpack.c.h.b16 %v358
      %v1078 = vunpack.c.l.b16 %v359
      %v1079 = vunpack.c.h.b16 %v359
      %v1080 = vunpack.c.l.b16 %v360
      %v1081 = vunpack.c.h.b16 %v360
      %v1082 = vunpack.c.l.b16 %v361
      %v1083 = vunpack.c.h.b16 %v361
      %v1084 = vunpack.c.l.b16 %v362
      %v1085 = vunpack.c.h.b16 %v362
      %v1086 = vunpack.c.l.b16 %v363
      %v1087 = vunpack.c.h.b16 %v363
      %v1088 = vunpack.c.l.b16 %v364
      %v1089 = vunpack.c.h.b16 %v364
      %v1090 = vunpack.c.l.b16 %v365
      %v1091 = vunpack.c.h.b16 %v365
      %v1092 = vunpack.c.l.b16 %v366
      %v1093 = vunpack.c.h.b16 %v366
      %v1094 = vunpack.c.l.b16 %v367
      %v1095 = vunpack.c.h.b16 %v367
      %v1096 = vunpack.c.l.b16 %v368
      %v1097 = vunpack.c.h.b16 %v368
      %v1098 = vunpack.c.l.b16 %v369
      %v1099 = vunpack.c.h.b16 %v369
      %v1100 = vunpack.c.l.b16 %v370
      %v1101 = vunpack.c.h.b16 %v370
      %v1102 = vunpack.c.l.b16 %v371
      %v1103 = vunpack.c.h.b16 %v371
      %v1104 = vunpack.c.l.b16 %v372
      %v1105 = vunpack.c.h.b16 %v372
      %v1106 = vunpack.c.l.b16 %v373
      %v1107 = vunpack.c.h.b16 %v373
      %v1108 = vunpack.c.l.b16 %v374
      %v1109 = vunpack.c.h.b16 %v374
      %v1110 = vunpack.c.l.b16 %v375
      %v1111 = vunpack.c.h.b16 %v375
      %v1112 = vunpack.c.l.b16 %v376
      %v1113 = vunpack.c.h.b16 %v376
      %v1114 = vunpack.c.l.b16 %v377
      %v1115 = vunpack.c.h.b16 %v377
      %v1116 = vunpack.c.l.b16 %v378
      %v1117 = vunpack.c.h.b16 %v378
      %v1118 = vunpack.c.l.b16 %v379
      %v1119 = vunpack.c.h.b16 %v379
      %v1120 = vunpack.c.l.b16 %v380
      %v1121 = vunpack.c.h.b16 %v380
      %v1122 = vunpack.c.l.b16 %v381
      %v1123 = vunpack.c.h.b16 %v381
      %v1124 = vunpack.c.l.b16 %v382
      %v1125 = vunpack.c.h.b16 %v382
      %v1126 = vunpack.c.l.b16 %v383
      %v1127 = vunpack.c.h.b16 %v383
      %v1128 = vunpack.c.l.b16 %v384
      %v1129 = vunpack.c.h.b16 %v384
      %v1130 = vunpack.c.l.b16 %v385
      %v1131 = vunpack.c.h.b16 %v385
      %v1132 = vunpack.c.l.b16 %v386
      %v1133 = vunpack.c.h.b16 %v386
      %v1134 = vunpack.c.l.b16 %v387
      %v1135 = vunpack.c.h.b16 %v387
      %v1136 = vunpack.c.l.b16 %v388
      %v1137 = vunpack.c.h.b16 %v388
      %v1138 = vunpack.c.l.b16 %v389
      %v1139 = vunpack.c.h.b16 %v389
      %v1140 = vunpack.c.l.b16 %v390
      %v1141 = vunpack.c.h.b16 %v390
      %v1142 = vunpack.c.l.b16 %v391
      %v1143 = vunpack.c.h.b16 %v391
      %v1144 = vunpack.c.l.b16 %v392
      %v1145 = vunpack.c.h.b16 %v392
      %v1146 = vunpack.c.l.b16 %v393
      %v1147 = vunpack.c.h.b16 %v393
      %v1148 = vunpack.c.l.b16 %v394
      %v1149 = vunpack.c.h.b16 %v394
      %v1150 = vunpack.c.l.b16 %v395
      %v1151 = vunpack.c.h.b16 %v395
      %v1152 = vunpack.c.l.b16 %v396
      %v1153 = vunpack.c.h.b16 %v396
      %v1154 = vunpack.c.l.b16 %v397
      %v1155 = vunpack.c.h.b16 %v397
      %v1156 = vunpack.c.l.b16 %v398
      %v1157 = vunpack.c.h.b16 %v398
      %v1158 = vunpack.c.l.b16 %v399
      %v1159 = vunpack.c.h.b16 %v399
      %v1160 = vunpack.c.l.b16 %v400
      %v1161 = vunpack.c.h.b16 %v400
      %v1162 = vunpack.c.l.b16 %v401
      %v1163 = vunpack.c.h.b16 %v401
      %v1164 = vunpack.c.l.b16 %v402
      %v1165 = vunpack.c.h.b16 %v402
      %v1166 = vunpack.c.l.b16 %v403
      %v1167 = vunpack.c.h.b16 %v403
      %v1168 = vunpack.c.l.b16 %v404
      %v1169 = vunpack.c.h.b16 %v404
      %v1170 = vunpack.c.l.b16 %v405
      %v1171 = vunpack.c.h.b16 %v405
      %v1172 = vunpack.c.l.b16 %v406
      %v1173 = vunpack.c.h.b16 %v406
      %v1174 = vunpack.c.l.b16 %v407
      %v1175 = vunpack.c.h.b16 %v407
      %v1176 = vunpack.c.l.b16 %v408
      %v1177 = vunpack.c.h.b16 %v408
      %v1178 = vunpack.c.l.b16 %v409
      %v1179 = vunpack.c.h.b16 %v409
      %v1180 = vunpack.c.l.b16 %v410
      %v1181 = vunpack.c.h.b16 %v410
      %v1182 = vunpack.c.l.b16 %v411
      %v1183 = vunpack.c.h.b16 %v411
      %v1184 = vunpack.c.l.b16 %v412
      %v1185 = vunpack.c.h.b16 %v412
      %v1186 = vunpack.c.l.b16 %v413
      %v1187 = vunpack.c.h.b16 %v413
      %v1188 = vunpack.c.l.b16 %v414
      %v1189 = vunpack.c.h.b16 %v414
      %v1190 = vunpack.c.l.b16 %v415
      %v1191 = vunpack.c.h.b16 %v415
      %v1192 = vunpack.c.l.b16 %v416
      %v1193 = vunpack.c.h.b16 %v416
      %v1194 = vunpack.c.l.b16 %v417
      %v1195 = vunpack.c.h.b16 %v417
      %v1196 = vunpack.c.l.b16 %v418
      %v1197 = vunpack.c.h.b16 %v418
      %v1198 = vunpack.c.l.b16 %v419
      %v1199 = vunpack.c.h.b16 %v419
      %v1200 = vunpack.c.l.b16 %v420
      %v1201 = vunpack.c.h.b16 %v420
      %v1202 = vunpack.c.l.b16 %v421
      %v1203 = vunpack.c.h.b16 %v421
      %v1204 = vunpack.c.l.b16 %v422
      %v1205 = vunpack.c.h.b16 %v422
      %v1206 = vunpack.c.l.b16 %v423
      %v1207 = vunpack.c.h.b16 %v423
      %v1208 = vunpack.c.l.b16 %v424
      %v1209 = vunpack.c.h.b16 %v424
      %v1210 = vunpack.c.l.b16 %v425
      %v1211 = vunpack.c.h.b16 %v425
      %v1212 = vpack.c.b16 %v708, %v700
      %v1213 = vpack.c.b16 %v709, %v701
      %v1214 = vpack.c.b16 %v710, %v702
      %v1215 = vpack.c.b16 %v711, %v703
      %v1216 = vpack.c.b16 %v712, %v704
      %v1217 = vpack.c.b16 %v713, %v705
      %v1218 = vpack.c.b16 %v714, %v706
      %v1219 = vpack.c.b16 %v715, %v707
      %v1220 = vpack.c.b16 %v724, %v716
      %v1221 = vpack.c.b16 %v725, %v717
      %v1222 = vpack.c.b16 %v726, %v718
      %v1223 = vpack.c.b16 %v727, %v719
      %v1224 = vpack.c.b16 %v728, %v720
      %v1225 = vpack.c.b16 %v729, %v721
      %v1226 = vpack.c.b16 %v730, %v722
      %v1227 = vpack.c.b16 %v731, %v723
      %v1228 = vpack.c.b16 %v740, %v732
      %v1229 = vpack.c.b16 %v741, %v733
      %v1230 = vpack.c.b16 %v742, %v734
      %v1231 = vpack.c.b16 %v743, %v735
      %v1232 = vpack.c.b16 %v744, %v736
      %v1233 = vpack.c.b16 %v745, %v737
      %v1234 = vpack.c.b16 %v746, %v738
      %v1235 = vpack.c.b16 %v747, %v739
      %v1236 = vpack.c.b16 %v756, %v748
      %v1237 = vpack.c.b16 %v757, %v749
      %v1238 = vpack.c.b16 %v758, %v750
      %v1239 = vpack.c.b16 %v759, %v751
      %v1240 = vpack.c.b16 %v760, %v752
      %v1241 = vpack.c.b16 %v761, %v753
      %v1242 = vpack.c.b16 %v762, %v754
      %v1243 = vpack.c.b16 %v763, %v755
      %v1244 = vpack.c.b16 %v772, %v764
      %v1245 = vpack.c.b16 %v773, %v765
      %v1246 = vpack.c.b16 %v774, %v766
      %v1247 = vpack.c.b16 %v775, %v767
      %v1248 = vpack.c.b16 %v776, %v768
      %v1249 = vpack.c.b16 %v777, %v769
      %v1250 = vpack.c.b16 %v778, %v770
      %v1251 = vpack.c.b16 %v779, %v771
      %v1252 = vpack.c.b16 %v788, %v780
      %v1253 = vpack.c.b16 %v789, %v781
      %v1254 = vpack.c.b16 %v790, %v782
      %v1255 = vpack.c.b16 %v791, %v783
      %v1256 = vpack.c.b16 %v792, %v784
      %v1257 = vpack.c.b16 %v793, %v785
      %v1258 = vpack.c.b16 %v794, %v786
      %v1259 = vpack.c.b16 %v795, %v787
      %v1260 = vpack.c.b16 %v804, %v796
      %v1261 = vpack.c.b16 %v805, %v797
      %v1262 = vpack.c.b16 %v806, %v798
      %v1263 = vpack.c.b16 %v807, %v799
      %v1264 = vpack.c.b16 %v808, %v800
      %v1265 = vpack.c.b16 %v809, %v801
      %v1266 = vpack.c.b16 %v810, %v802
      %v1267 = vpack.c.b16 %v811, %v803
      %v1268 = vpack.c.b16 %v820, %v812
      %v1269 = vpack.c.b16 %v821, %v813
      %v1270 = vpack.c.b16 %v822, %v814
      %v1271 = vpack.c.b16 %v823, %v815
      %v1272 = vpack.c.b16 %v824, %v816
      %v1273 = vpack.c.b16 %v825, %v817
      %v1274 = vpack.c.b16 %v826, %v818
      %v1275 = vpack.c.b16 %v827, %v819
      %v1276 = vpack.c.b16 %v836, %v828
      %v1277 = vpack.c.b16 %v837, %v829
      %v1278 = vpack.c.b16 %v838, %v830
      %v1279 = vpack.c.b16 %v839, %v831
      %v1280 = vpack.c.b16 %v840, %v832
      %v1281 = vpack.c.b16 %v841, %v833
      %v1282 = vpack.c.b16 %v842, %v834
      %v1283 = vpack.c.b16 %v843, %v835
      %v1284 = vpack.c.b16 %v852, %v844
      %v1285 = vpack.c.b16 %v853, %v845
      %v1286 = vpack.c.b16 %v854, %v846
      %v1287 = vpack.c.b16 %v855, %v847
      %v1288 = vpack.c.b16 %v856, %v848
      %v1289 = vpack.c.b16 %v857, %v849
      %v1290 = vpack.c.b16 %v858, %v850
      %v1291 = vpack.c.b16 %v859, %v851
      %v1292 = vpack.c.b16 %v868, %v860
      %v1293 = vpack.c.b16 %v869, %v861
      %v1294 = vpack.c.b16 %v870, %v862
      %v1295 = vpack.c.b16 %v871, %v863
      %v1296 = vpack.c.b16 %v872, %v864
      %v1297 = vpack.c.b16 %v873, %v865
      %v1298 = vpack.c.b16 %v874, %v866
      %v1299 = vpack.c.b16 %v875, %v867
      %v1300 = vpack.c.b16 %v884, %v876
      %v1301 = vpack.c.b16 %v885, %v877
      %v1302 = vpack.c.b16 %v886, %v878
      %v1303 = vpack.c.b16 %v887, %v879
      %v1304 = vpack.c.b16 %v888, %v880
      %v1305 = vpack.c.b16 %v889, %v881
      %v1306 = vpack.c.b16 %v890, %v882
      %v1307 = vpack.c.b16 %v891, %v883
      %v1308 = vpack.c.b16 %v900, %v892
      %v1309 = vpack.c.b16 %v901, %v893
      %v1310 = vpack.c.b16 %v902, %v894
      %v1311 = vpack.c.b16 %v903, %v895
      %v1312 = vpack.c.b16 %v904, %v896
      %v1313 = vpack.c.b16 %v905, %v897
      %v1314 = vpack.c.b16 %v906, %v898
      %v1315 = vpack.c.b16 %v907, %v899
      %v1316 = vpack.c.b16 %v916, %v908
      %v1317 = vpack.c.b16 %v917, %v909
      %v1318 = vpack.c.b16 %v918, %v910
      %v1319 = vpack.c.b16 %v919, %v911
      %v1320 = vpack.c.b16 %v920, %v912
      %v1321 = vpack.c.b16 %v921, %v913
      %v1322 = vpack.c.b16 %v922, %v914
      %v1323 = vpack.c.b16 %v923, %v915
      %v1324 = vpack.c.b16 %v932, %v924
      %v1325 = vpack.c.b16 %v933, %v925
      %v1326 = vpack.c.b16 %v934, %v926
      %v1327 = vpack.c.b16 %v935, %v927
      %v1328 = vpack.c.b16 %v936, %v928
      %v1329 = vpack.c.b16 %v937, %v929
      %v1330 = vpack.c.b16 %v938, %v930
      %v1331 = vpack.c.b16 %v939, %v931
      %v1332 = vpack.c.b16 %v948, %v940
      %v1333 = vpack.c.b16 %v949, %v941
      %v1334 = vpack.c.b16 %v950, %v942
      %v1335 = vpack.c.b16 %v951, %v943
      %v1336 = vpack.c.b16 %v952, %v944
      %v1337 = vpack.c.b16 %v953, %v945
      %v1338 = vpack.c.b16 %v954, %v946
      %v1339 = vpack.c.b16 %v955, %v947
      %v1340 = vpack.c.b16 %v964, %v956
      %v1341 = vpack.c.b16 %v965, %v957
      %v1342 = vpack.c.b16 %v966, %v958
      %v1343 = vpack.c.b16 %v967, %v959
      %v1344 = vpack.c.b16 %v968, %v960
      %v1345 = vpack.c.b16 %v969, %v961
      %v1346 = vpack.c.b16 %v970, %v962
      %v1347 = vpack.c.b16 %v971, %v963
      %v1348 = vpack.c.b16 %v980, %v972
      %v1349 = vpack.c.b16 %v981, %v973
      %v1350 = vpack.c.b16 %v982, %v974
      %v1351 = vpack.c.b16 %v983, %v975
      %v1352 = vpack.c.b16 %v984, %v976
      %v1353 = vpack.c.b16 %v985, %v977
      %v1354 = vpack.c.b16 %v986, %v978
      %v1355 = vpack.c.b16 %v987, %v979
      %v1356 = vpack.c.b16 %v996, %v988
      %v1357 = vpack.c.b16 %v997, %v989
      %v1358 = vpack.c.b16 %v998, %v990
      %v1359 = vpack.c.b16 %v999, %v991
      %v1360 = vpack.c.b16 %v1000, %v992
      %v1361 = vpack.c.b16 %v1001, %v993
      %v1362 = vpack.c.b16 %v1002, %v994
      %v1363 = vpack.c.b16 %v1003, %v995
      %v1364 = vpack.c.b16 %v1012, %v1004
      %v1365 = vpack.c.b16 %v1013, %v1005
      %v1366 = vpack.c.b16 %v1014, %v1006
      %v1367 = vpack.c.b16 %v1015, %v1007
      %v1368 = vpack.c.b16 %v1016, %v1008
      %v1369 = vpack.c.b16 %v1017, %v1009
      %v1370 = vpack.c.b16 %v1018, %v1010
      %v1371 = vpack.c.b16 %v1019, %v1011
      %v1372 = vpack.c.b16 %v1028, %v1020
      %v1373 = vpack.c.b16 %v1029, %v1021
      %v1374 = vpack.c.b16 %v1030, %v1022
      %v1375 = vpack.c.b16 %v1031, %v1023
      %v1376 = vpack.c.b16 %v1032, %v1024
      %v1377 = vpack.c.b16 %v1033, %v1025
      %v1378 = vpack.c.b16 %v1034, %v1026
      %v1379 = vpack.c.b16 %v1035, %v1027
      %v1380 = vpack.c.b16 %v1044, %v1036
      %v1381 = vpack.c.b16 %v1045, %v1037
      %v1382 = vpack.c.b16 %v1046, %v1038
      %v1383 = vpack.c.b16 %v1047, %v1039
      %v1384 = vpack.c.b16 %v1048, %v1040
      %v1385 = vpack.c.b16 %v1049, %v1041
      %v1386 = vpack.c.b16 %v1050, %v1042
      %v1387 = vpack.c.b16 %v1051, %v1043
      %v1388 = vpack.c.b16 %v1060, %v1052
      %v1389 = vpack.c.b16 %v1061, %v1053
      %v1390 = vpack.c.b16 %v1062, %v1054
      %v1391 = vpack.c.b16 %v1063, %v1055
      %v1392 = vpack.c.b16 %v1064, %v1056
      %v1393 = vpack.c.b16 %v1065, %v1057
      %v1394 = vpack.c.b16 %v1066, %v1058
      %v1395 = vpack.c.b16 %v1067, %v1059
      %v1396 = vpack.c.b16 %v1076, %v1068
      %v1397 = vpack.c.b16 %v1077, %v1069
      %v1398 = vpack.c.b16 %v1078, %v1070
      %v1399 = vpack.c.b16 %v1079, %v1071
      %v1400 = vpack.c.b16 %v1080, %v1072
      %v1401 = vpack.c.b16 %v1081, %v1073
      %v1402 = vpack.c.b16 %v1082, %v1074
      %v1403 = vpack.c.b16 %v1083, %v1075
      %v1404 = vpack.c.b16 %v1092, %v1084
      %v1405 = vpack.c.b16 %v1093, %v1085
      %v1406 = vpack.c.b16 %v1094, %v1086
      %v1407 = vpack.c.b16 %v1095, %v1087
      %v1408 = vpack.c.b16 %v1096, %v1088
      %v1409 = vpack.c.b16 %v1097, %v1089
      %v1410 = vpack.c.b16 %v1098, %v1090
      %v1411 = vpack.c.b16 %v1099, %v1091
      %v1412 = vpack.c.b16 %v1108, %v1100
      %v1413 = vpack.c.b16 %v1109, %v1101
      %v1414 = vpack.c.b16 %v1110, %v1102
      %v1415 = vpack.c.b16 %v1111, %v1103
      %v1416 = vpack.c.b16 %v1112, %v1104
      %v1417 = vpack.c.b16 %v1113, %v1105
      %v1418 = vpack.c.b16 %v1114, %v1106
      %v1419 = vpack.c.b16 %v1115, %v1107
      %v1420 = vpack.c.b16 %v1124, %v1116
      %v1421 = vpack.c.b16 %v1125, %v1117
      %v1422 = vpack.c.b16 %v1126, %v1118
      %v1423 = vpack.c.b16 %v1127, %v1119
      %v1424 = vpack.c.b16 %v1128, %v1120
      %v1425 = vpack.c.b16 %v1129, %v1121
      %v1426 = vpack.c.b16 %v1130, %v1122
      %v1427 = vpack.c.b16 %v1131, %v1123
      %v1428 = vpack.c.b16 %v1140, %v1132
      %v1429 = vpack.c.b16 %v1141, %v1133
      %v1430 = vpack.c.b16 %v1142, %v1134
      %v1431 = vpack.c.b16 %v1143, %v1135
      %v1432 = vpack.c.b16 %v1144, %v1136
      %v1433 = vpack.c.b16 %v1145, %v1137
      %v1434 = vpack.c.b16 %v1146, %v1138
      %v1435 = vpack.c.b16 %v1147, %v1139
      %v1436 = vpack.c.b16 %v1156, %v1148
      %v1437 = vpack.c.b16 %v1157, %v1149
      %v1438 = vpack.c.b16 %v1158, %v1150
      %v1439 = vpack.c.b16 %v1159, %v1151
      %v1440 = vpack.c.b16 %v1160, %v1152
      %v1441 = vpack.c.b16 %v1161, %v1153
      %v1442 = vpack.c.b16 %v1162, %v1154
      %v1443 = vpack.c.b16 %v1163, %v1155
      %v1444 = vpack.c.b16 %v1172, %v1164
      %v1445 = vpack.c.b16 %v1173, %v1165
      %v1446 = vpack.c.b16 %v1174, %v1166
      %v1447 = vpack.c.b16 %v1175, %v1167
      %v1448 = vpack.c.b16 %v1176, %v1168
      %v1449 = vpack.c.b16 %v1177, %v1169
      %v1450 = vpack.c.b16 %v1178, %v1170
      %v1451 = vpack.c.b16 %v1179, %v1171
      %v1452 = vpack.c.b16 %v1188, %v1180
      %v1453 = vpack.c.b16 %v1189, %v1181
      %v1454 = vpack.c.b16 %v1190, %v1182
      %v1455 = vpack.c.b16 %v1191, %v1183
      %v1456 = vpack.c.b16 %v1192, %v1184
      %v1457 = vpack.c.b16 %v1193, %v1185
      %v1458 = vpack.c.b16 %v1194, %v1186
      %v1459 = vpack.c.b16 %v1195, %v1187
      %v1460 = vpack.c.b16 %v1204, %v1196
      %v1461 = vpack.c.b16 %v1205, %v1197
      %v1462 = vpack.c.b16 %v1206, %v1198
      %v1463 = vpack.c.b16 %v1207, %v1199
      %v1464 = vpack.c.b16 %v1208, %v1200
      %v1465 = vpack.c.b16 %v1209, %v1201
      %v1466 = vpack.c.b16 %v1210, %v1202
      %v1467 = vpack.c.b16 %v1211, %v1203
      %1724 = vmatpush.bf16.msra.mxu0 %v1268
      %1725 = vmatpush.bf16.msra.mxu0 %v1260
      %1726 = vmatpush.bf16.msra.mxu0 %v1252
      %1727 = vmatpush.bf16.msra.mxu0 %v1244
      %1728 = vmatpush.bf16.msra.mxu0 %v1236
      %1729 = vmatpush.bf16.msra.mxu0 %v1228
      %1730 = vmatpush.bf16.msra.mxu0 %v1220
      %1731 = vmatpush.bf16.msra.mxu0 %v1212
      %1732 = vmatmul.bf16.gmra.mxu0 %v166
      %v1733 = vpop.f32.mrf.mxu0
      %v1734 = vadd.f32 %v428, %v1733
      %v1735 = vpop.f32.mrf.mxu0
      %1736 = vdwg.mxu0
      %1737 = vmatpush.bf16.msra.mxu0 %v1332
      %1738 = vmatpush.bf16.msra.mxu0 %v1324
      %1739 = vmatpush.bf16.msra.mxu0 %v1316
      %1740 = vmatpush.bf16.msra.mxu0 %v1308
      %1741 = vmatpush.bf16.msra.mxu0 %v1300
      %1742 = vmatpush.bf16.msra.mxu0 %v1292
      %1743 = vmatpush.bf16.msra.mxu0 %v1284
      %1744 = vmatpush.bf16.msra.mxu0 %v1276
      %1745 = vmatmul.bf16.gmra.mxu0 %v167
      %v1746 = vpop.f32.mrf.mxu0
      %v1747 = vadd.f32 %v1734, %v1746
      %v1748 = vpop.f32.mrf.mxu0
      %1749 = vdwg.mxu0
      %1750 = vmatpush.bf16.msra.mxu0 %v1396
      %1751 = vmatpush.bf16.msra.mxu0 %v1388
      %1752 = vmatpush.bf16.msra.mxu0 %v1380
      %1753 = vmatpush.bf16.msra.mxu0 %v1372
      %1754 = vmatpush.bf16.msra.mxu0 %v1364
      %1755 = vmatpush.bf16.msra.mxu0 %v1356
      %1756 = vmatpush.bf16.msra.mxu0 %v1348
      %1757 = vmatpush.bf16.msra.mxu0 %v1340
      %1758 = vmatmul.bf16.gmra.mxu0 %v168
      %v1759 = vpop.f32.mrf.mxu0
      %v1760 = vadd.f32 %v1747, %v1759
      %v1761 = vpop.f32.mrf.mxu0
      %1762 = vdwg.mxu0
      %1763 = vmatpush.bf16.msra.mxu0 %v1460
      %1764 = vmatpush.bf16.msra.mxu0 %v1452
      %1765 = vmatpush.bf16.msra.mxu0 %v1444
      %1766 = vmatpush.bf16.msra.mxu0 %v1436
      %1767 = vmatpush.bf16.msra.mxu0 %v1428
      %1768 = vmatpush.bf16.msra.mxu0 %v1420
      %1769 = vmatpush.bf16.msra.mxu0 %v1412
      %1770 = vmatpush.bf16.msra.mxu0 %v1404
      %1771 = vmatmul.bf16.gmra.mxu0 %v169
      %v1772 = vpop.f32.mrf.mxu0
      %v1773 = vadd.f32 %v1760, %v1772
      %v1774 = vpop.f32.mrf.mxu0
      %1775 = vdwg.mxu0
      %1776 = vmatpush.bf16.msra.mxu0 %v1269
      %1777 = vmatpush.bf16.msra.mxu0 %v1261
      %1778 = vmatpush.bf16.msra.mxu0 %v1253
      %1779 = vmatpush.bf16.msra.mxu0 %v1245
      %1780 = vmatpush.bf16.msra.mxu0 %v1237
      %1781 = vmatpush.bf16.msra.mxu0 %v1229
      %1782 = vmatpush.bf16.msra.mxu0 %v1221
      %1783 = vmatpush.bf16.msra.mxu0 %v1213
      %1784 = vmatmul.bf16.gmra.mxu0 %v166
      %v1785 = vpop.f32.mrf.mxu0
      %v1786 = vadd.f32 %v429, %v1785
      %v1787 = vpop.f32.mrf.mxu0
      %1788 = vdwg.mxu0
      %1789 = vmatpush.bf16.msra.mxu0 %v1333
      %1790 = vmatpush.bf16.msra.mxu0 %v1325
      %1791 = vmatpush.bf16.msra.mxu0 %v1317
      %1792 = vmatpush.bf16.msra.mxu0 %v1309
      %1793 = vmatpush.bf16.msra.mxu0 %v1301
      %1794 = vmatpush.bf16.msra.mxu0 %v1293
      %1795 = vmatpush.bf16.msra.mxu0 %v1285
      %1796 = vmatpush.bf16.msra.mxu0 %v1277
      %1797 = vmatmul.bf16.gmra.mxu0 %v167
      %v1798 = vpop.f32.mrf.mxu0
      %v1799 = vadd.f32 %v1786, %v1798
      %v1800 = vpop.f32.mrf.mxu0
      %1801 = vdwg.mxu0
      %1802 = vmatpush.bf16.msra.mxu0 %v1397
      %1803 = vmatpush.bf16.msra.mxu0 %v1389
      %1804 = vmatpush.bf16.msra.mxu0 %v1381
      %1805 = vmatpush.bf16.msra.mxu0 %v1373
      %1806 = vmatpush.bf16.msra.mxu0 %v1365
      %1807 = vmatpush.bf16.msra.mxu0 %v1357
      %1808 = vmatpush.bf16.msra.mxu0 %v1349
      %1809 = vmatpush.bf16.msra.mxu0 %v1341
      %1810 = vmatmul.bf16.gmra.mxu0 %v168
      %v1811 = vpop.f32.mrf.mxu0
      %v1812 = vadd.f32 %v1799, %v1811
      %v1813 = vpop.f32.mrf.mxu0
      %1814 = vdwg.mxu0
      %1815 = vmatpush.bf16.msra.mxu0 %v1461
      %1816 = vmatpush.bf16.msra.mxu0 %v1453
      %1817 = vmatpush.bf16.msra.mxu0 %v1445
      %1818 = vmatpush.bf16.msra.mxu0 %v1437
      %1819 = vmatpush.bf16.msra.mxu0 %v1429
      %1820 = vmatpush.bf16.msra.mxu0 %v1421
      %1821 = vmatpush.bf16.msra.mxu0 %v1413
      %1822 = vmatpush.bf16.msra.mxu0 %v1405
      %1823 = vmatmul.bf16.gmra.mxu0 %v169
      %v1824 = vpop.f32.mrf.mxu0
      %v1825 = vadd.f32 %v1812, %v1824
      %v1826 = vpop.f32.mrf.mxu0
      %1827 = vdwg.mxu0
      %1828 = vmatpush.bf16.msra.mxu0 %v1270
      %1829 = vmatpush.bf16.msra.mxu0 %v1262
      %1830 = vmatpush.bf16.msra.mxu0 %v1254
      %1831 = vmatpush.bf16.msra.mxu0 %v1246
      %1832 = vmatpush.bf16.msra.mxu0 %v1238
      %1833 = vmatpush.bf16.msra.mxu0 %v1230
      %1834 = vmatpush.bf16.msra.mxu0 %v1222
      %1835 = vmatpush.bf16.msra.mxu0 %v1214
      %1836 = vmatmul.bf16.gmra.mxu0 %v166
      %v1837 = vpop.f32.mrf.mxu0
      %v1838 = vadd.f32 %v430, %v1837
      %v1839 = vpop.f32.mrf.mxu0
      %1840 = vdwg.mxu0
      %1841 = vmatpush.bf16.msra.mxu0 %v1334
      %1842 = vmatpush.bf16.msra.mxu0 %v1326
      %1843 = vmatpush.bf16.msra.mxu0 %v1318
      %1844 = vmatpush.bf16.msra.mxu0 %v1310
      %1845 = vmatpush.bf16.msra.mxu0 %v1302
      %1846 = vmatpush.bf16.msra.mxu0 %v1294
      %1847 = vmatpush.bf16.msra.mxu0 %v1286
      %1848 = vmatpush.bf16.msra.mxu0 %v1278
      %1849 = vmatmul.bf16.gmra.mxu0 %v167
      %v1850 = vpop.f32.mrf.mxu0
      %v1851 = vadd.f32 %v1838, %v1850
      %v1852 = vpop.f32.mrf.mxu0
      %1853 = vdwg.mxu0
      %1854 = vmatpush.bf16.msra.mxu0 %v1398
      %1855 = vmatpush.bf16.msra.mxu0 %v1390
      %1856 = vmatpush.bf16.msra.mxu0 %v1382
      %1857 = vmatpush.bf16.msra.mxu0 %v1374
      %1858 = vmatpush.bf16.msra.mxu0 %v1366
      %1859 = vmatpush.bf16.msra.mxu0 %v1358
      %1860 = vmatpush.bf16.msra.mxu0 %v1350
      %1861 = vmatpush.bf16.msra.mxu0 %v1342
      %1862 = vmatmul.bf16.gmra.mxu0 %v168
      %v1863 = vpop.f32.mrf.mxu0
      %v1864 = vadd.f32 %v1851, %v1863
      %v1865 = vpop.f32.mrf.mxu0
      %1866 = vdwg.mxu0
      %1867 = vmatpush.bf16.msra.mxu0 %v1462
      %1868 = vmatpush.bf16.msra.mxu0 %v1454
      %1869 = vmatpush.bf16.msra.mxu0 %v1446
      %1870 = vmatpush.bf16.msra.mxu0 %v1438
      %1871 = vmatpush.bf16.msra.mxu0 %v1430
      %1872 = vmatpush.bf16.msra.mxu0 %v1422
      %1873 = vmatpush.bf16.msra.mxu0 %v1414
      %1874 = vmatpush.bf16.msra.mxu0 %v1406
      %1875 = vmatmul.bf16.gmra.mxu0 %v169
      %v1876 = vpop.f32.mrf.mxu0
      %v1877 = vadd.f32 %v1864, %v1876
      %v1878 = vpop.f32.mrf.mxu0
      %1879 = vdwg.mxu0
      %1880 = vmatpush.bf16.msra.mxu0 %v1271
      %1881 = vmatpush.bf16.msra.mxu0 %v1263
      %1882 = vmatpush.bf16.msra.mxu0 %v1255
      %1883 = vmatpush.bf16.msra.mxu0 %v1247
      %1884 = vmatpush.bf16.msra.mxu0 %v1239
      %1885 = vmatpush.bf16.msra.mxu0 %v1231
      %1886 = vmatpush.bf16.msra.mxu0 %v1223
      %1887 = vmatpush.bf16.msra.mxu0 %v1215
      %1888 = vmatmul.bf16.gmra.mxu0 %v166
      %v1889 = vpop.f32.mrf.mxu0
      %v1890 = vadd.f32 %v431, %v1889
      %v1891 = vpop.f32.mrf.mxu0
      %1892 = vdwg.mxu0
      %1893 = vmatpush.bf16.msra.mxu0 %v1335
      %1894 = vmatpush.bf16.msra.mxu0 %v1327
      %1895 = vmatpush.bf16.msra.mxu0 %v1319
      %1896 = vmatpush.bf16.msra.mxu0 %v1311
      %1897 = vmatpush.bf16.msra.mxu0 %v1303
      %1898 = vmatpush.bf16.msra.mxu0 %v1295
      %1899 = vmatpush.bf16.msra.mxu0 %v1287
      %1900 = vmatpush.bf16.msra.mxu0 %v1279
      %1901 = vmatmul.bf16.gmra.mxu0 %v167
      %v1902 = vpop.f32.mrf.mxu0
      %v1903 = vadd.f32 %v1890, %v1902
      %v1904 = vpop.f32.mrf.mxu0
      %1905 = vdwg.mxu0
      %1906 = vmatpush.bf16.msra.mxu0 %v1399
      %1907 = vmatpush.bf16.msra.mxu0 %v1391
      %1908 = vmatpush.bf16.msra.mxu0 %v1383
      %1909 = vmatpush.bf16.msra.mxu0 %v1375
      %1910 = vmatpush.bf16.msra.mxu0 %v1367
      %1911 = vmatpush.bf16.msra.mxu0 %v1359
      %1912 = vmatpush.bf16.msra.mxu0 %v1351
      %1913 = vmatpush.bf16.msra.mxu0 %v1343
      %1914 = vmatmul.bf16.gmra.mxu0 %v168
      %v1915 = vpop.f32.mrf.mxu0
      %v1916 = vadd.f32 %v1903, %v1915
      %v1917 = vpop.f32.mrf.mxu0
      %1918 = vdwg.mxu0
      %1919 = vmatpush.bf16.msra.mxu0 %v1463
      %1920 = vmatpush.bf16.msra.mxu0 %v1455
      %1921 = vmatpush.bf16.msra.mxu0 %v1447
      %1922 = vmatpush.bf16.msra.mxu0 %v1439
      %1923 = vmatpush.bf16.msra.mxu0 %v1431
      %1924 = vmatpush.bf16.msra.mxu0 %v1423
      %1925 = vmatpush.bf16.msra.mxu0 %v1415
      %1926 = vmatpush.bf16.msra.mxu0 %v1407
      %1927 = vmatmul.bf16.gmra.mxu0 %v169
      %v1928 = vpop.f32.mrf.mxu0
      %v1929 = vadd.f32 %v1916, %v1928
      %v1930 = vpop.f32.mrf.mxu0
      %1931 = vdwg.mxu0
      %1932 = vmatpush.bf16.msra.mxu0 %v1272
      %1933 = vmatpush.bf16.msra.mxu0 %v1264
      %1934 = vmatpush.bf16.msra.mxu0 %v1256
      %1935 = vmatpush.bf16.msra.mxu0 %v1248
      %1936 = vmatpush.bf16.msra.mxu0 %v1240
      %1937 = vmatpush.bf16.msra.mxu0 %v1232
      %1938 = vmatpush.bf16.msra.mxu0 %v1224
      %1939 = vmatpush.bf16.msra.mxu0 %v1216
      %1940 = vmatmul.bf16.gmra.mxu0 %v166
      %v1941 = vpop.f32.mrf.mxu0
      %v1942 = vadd.f32 %v432, %v1941
      %v1943 = vpop.f32.mrf.mxu0
      %1944 = vdwg.mxu0
      %1945 = vmatpush.bf16.msra.mxu0 %v1336
      %1946 = vmatpush.bf16.msra.mxu0 %v1328
      %1947 = vmatpush.bf16.msra.mxu0 %v1320
      %1948 = vmatpush.bf16.msra.mxu0 %v1312
      %1949 = vmatpush.bf16.msra.mxu0 %v1304
      %1950 = vmatpush.bf16.msra.mxu0 %v1296
      %1951 = vmatpush.bf16.msra.mxu0 %v1288
      %1952 = vmatpush.bf16.msra.mxu0 %v1280
      %1953 = vmatmul.bf16.gmra.mxu0 %v167
      %v1954 = vpop.f32.mrf.mxu0
      %v1955 = vadd.f32 %v1942, %v1954
      %v1956 = vpop.f32.mrf.mxu0
      %1957 = vdwg.mxu0
      %1958 = vmatpush.bf16.msra.mxu0 %v1400
      %1959 = vmatpush.bf16.msra.mxu0 %v1392
      %1960 = vmatpush.bf16.msra.mxu0 %v1384
      %1961 = vmatpush.bf16.msra.mxu0 %v1376
      %1962 = vmatpush.bf16.msra.mxu0 %v1368
      %1963 = vmatpush.bf16.msra.mxu0 %v1360
      %1964 = vmatpush.bf16.msra.mxu0 %v1352
      %1965 = vmatpush.bf16.msra.mxu0 %v1344
      %1966 = vmatmul.bf16.gmra.mxu0 %v168
      %v1967 = vpop.f32.mrf.mxu0
      %v1968 = vadd.f32 %v1955, %v1967
      %v1969 = vpop.f32.mrf.mxu0
      %1970 = vdwg.mxu0
      %1971 = vmatpush.bf16.msra.mxu0 %v1464
      %1972 = vmatpush.bf16.msra.mxu0 %v1456
      %1973 = vmatpush.bf16.msra.mxu0 %v1448
      %1974 = vmatpush.bf16.msra.mxu0 %v1440
      %1975 = vmatpush.bf16.msra.mxu0 %v1432
      %1976 = vmatpush.bf16.msra.mxu0 %v1424
      %1977 = vmatpush.bf16.msra.mxu0 %v1416
      %1978 = vmatpush.bf16.msra.mxu0 %v1408
      %1979 = vmatmul.bf16.gmra.mxu0 %v169
      %v1980 = vpop.f32.mrf.mxu0
      %v1981 = vadd.f32 %v1968, %v1980
      %v1982 = vpop.f32.mrf.mxu0
      %1983 = vdwg.mxu0
      %1984 = vmatpush.bf16.msra.mxu0 %v1273
      %1985 = vmatpush.bf16.msra.mxu0 %v1265
      %1986 = vmatpush.bf16.msra.mxu0 %v1257
      %1987 = vmatpush.bf16.msra.mxu0 %v1249
      %1988 = vmatpush.bf16.msra.mxu0 %v1241
      %1989 = vmatpush.bf16.msra.mxu0 %v1233
      %1990 = vmatpush.bf16.msra.mxu0 %v1225
      %1991 = vmatpush.bf16.msra.mxu0 %v1217
      %1992 = vmatmul.bf16.gmra.mxu0 %v166
      %v1993 = vpop.f32.mrf.mxu0
      %v1994 = vadd.f32 %v433, %v1993
      %v1995 = vpop.f32.mrf.mxu0
      %1996 = vdwg.mxu0
      %1997 = vmatpush.bf16.msra.mxu0 %v1337
      %1998 = vmatpush.bf16.msra.mxu0 %v1329
      %1999 = vmatpush.bf16.msra.mxu0 %v1321
      %2000 = vmatpush.bf16.msra.mxu0 %v1313
      %2001 = vmatpush.bf16.msra.mxu0 %v1305
      %2002 = vmatpush.bf16.msra.mxu0 %v1297
      %2003 = vmatpush.bf16.msra.mxu0 %v1289
      %2004 = vmatpush.bf16.msra.mxu0 %v1281
      %2005 = vmatmul.bf16.gmra.mxu0 %v167
      %v2006 = vpop.f32.mrf.mxu0
      %v2007 = vadd.f32 %v1994, %v2006
      %v2008 = vpop.f32.mrf.mxu0
      %2009 = vdwg.mxu0
      %2010 = vmatpush.bf16.msra.mxu0 %v1401
      %2011 = vmatpush.bf16.msra.mxu0 %v1393
      %2012 = vmatpush.bf16.msra.mxu0 %v1385
      %2013 = vmatpush.bf16.msra.mxu0 %v1377
      %2014 = vmatpush.bf16.msra.mxu0 %v1369
      %2015 = vmatpush.bf16.msra.mxu0 %v1361
      %2016 = vmatpush.bf16.msra.mxu0 %v1353
      %2017 = vmatpush.bf16.msra.mxu0 %v1345
      %2018 = vmatmul.bf16.gmra.mxu0 %v168
      %v2019 = vpop.f32.mrf.mxu0
      %v2020 = vadd.f32 %v2007, %v2019
      %v2021 = vpop.f32.mrf.mxu0
      %2022 = vdwg.mxu0
      %2023 = vmatpush.bf16.msra.mxu0 %v1465
      %2024 = vmatpush.bf16.msra.mxu0 %v1457
      %2025 = vmatpush.bf16.msra.mxu0 %v1449
      %2026 = vmatpush.bf16.msra.mxu0 %v1441
      %2027 = vmatpush.bf16.msra.mxu0 %v1433
      %2028 = vmatpush.bf16.msra.mxu0 %v1425
      %2029 = vmatpush.bf16.msra.mxu0 %v1417
      %2030 = vmatpush.bf16.msra.mxu0 %v1409
      %2031 = vmatmul.bf16.gmra.mxu0 %v169
      %v2032 = vpop.f32.mrf.mxu0
      %v2033 = vadd.f32 %v2020, %v2032
      %v2034 = vpop.f32.mrf.mxu0
      %2035 = vdwg.mxu0
      %2036 = vmatpush.bf16.msra.mxu0 %v1274
      %2037 = vmatpush.bf16.msra.mxu0 %v1266
      %2038 = vmatpush.bf16.msra.mxu0 %v1258
      %2039 = vmatpush.bf16.msra.mxu0 %v1250
      %2040 = vmatpush.bf16.msra.mxu0 %v1242
      %2041 = vmatpush.bf16.msra.mxu0 %v1234
      %2042 = vmatpush.bf16.msra.mxu0 %v1226
      %2043 = vmatpush.bf16.msra.mxu0 %v1218
      %2044 = vmatmul.bf16.gmra.mxu0 %v166
      %v2045 = vpop.f32.mrf.mxu0
      %v2046 = vadd.f32 %v434, %v2045
      %v2047 = vpop.f32.mrf.mxu0
      %2048 = vdwg.mxu0
      %2049 = vmatpush.bf16.msra.mxu0 %v1338
      %2050 = vmatpush.bf16.msra.mxu0 %v1330
      %2051 = vmatpush.bf16.msra.mxu0 %v1322
      %2052 = vmatpush.bf16.msra.mxu0 %v1314
      %2053 = vmatpush.bf16.msra.mxu0 %v1306
      %2054 = vmatpush.bf16.msra.mxu0 %v1298
      %2055 = vmatpush.bf16.msra.mxu0 %v1290
      %2056 = vmatpush.bf16.msra.mxu0 %v1282
      %2057 = vmatmul.bf16.gmra.mxu0 %v167
      %v2058 = vpop.f32.mrf.mxu0
      %v2059 = vadd.f32 %v2046, %v2058
      %v2060 = vpop.f32.mrf.mxu0
      %2061 = vdwg.mxu0
      %2062 = vmatpush.bf16.msra.mxu0 %v1402
      %2063 = vmatpush.bf16.msra.mxu0 %v1394
      %2064 = vmatpush.bf16.msra.mxu0 %v1386
      %2065 = vmatpush.bf16.msra.mxu0 %v1378
      %2066 = vmatpush.bf16.msra.mxu0 %v1370
      %2067 = vmatpush.bf16.msra.mxu0 %v1362
      %2068 = vmatpush.bf16.msra.mxu0 %v1354
      %2069 = vmatpush.bf16.msra.mxu0 %v1346
      %2070 = vmatmul.bf16.gmra.mxu0 %v168
      %v2071 = vpop.f32.mrf.mxu0
      %v2072 = vadd.f32 %v2059, %v2071
      %v2073 = vpop.f32.mrf.mxu0
      %2074 = vdwg.mxu0
      %2075 = vmatpush.bf16.msra.mxu0 %v1466
      %2076 = vmatpush.bf16.msra.mxu0 %v1458
      %2077 = vmatpush.bf16.msra.mxu0 %v1450
      %2078 = vmatpush.bf16.msra.mxu0 %v1442
      %2079 = vmatpush.bf16.msra.mxu0 %v1434
      %2080 = vmatpush.bf16.msra.mxu0 %v1426
      %2081 = vmatpush.bf16.msra.mxu0 %v1418
      %2082 = vmatpush.bf16.msra.mxu0 %v1410
      %2083 = vmatmul.bf16.gmra.mxu0 %v169
      %v2084 = vpop.f32.mrf.mxu0
      %v2085 = vadd.f32 %v2072, %v2084
      %v2086 = vpop.f32.mrf.mxu0
      %2087 = vdwg.mxu0
      %2088 = vmatpush.bf16.msra.mxu0 %v1275
      %2089 = vmatpush.bf16.msra.mxu0 %v1267
      %2090 = vmatpush.bf16.msra.mxu0 %v1259
      %2091 = vmatpush.bf16.msra.mxu0 %v1251
      %2092 = vmatpush.bf16.msra.mxu0 %v1243
      %2093 = vmatpush.bf16.msra.mxu0 %v1235
      %2094 = vmatpush.bf16.msra.mxu0 %v1227
      %2095 = vmatpush.bf16.msra.mxu0 %v1219
      %2096 = vmatmul.bf16.gmra.mxu0 %v166
      %v2097 = vpop.f32.mrf.mxu0
      %v2098 = vadd.f32 %v435, %v2097
      %v2099 = vpop.f32.mrf.mxu0
      %2100 = vdwg.mxu0
      %2101 = vmatpush.bf16.msra.mxu0 %v1339
      %2102 = vmatpush.bf16.msra.mxu0 %v1331
      %2103 = vmatpush.bf16.msra.mxu0 %v1323
      %2104 = vmatpush.bf16.msra.mxu0 %v1315
      %2105 = vmatpush.bf16.msra.mxu0 %v1307
      %2106 = vmatpush.bf16.msra.mxu0 %v1299
      %2107 = vmatpush.bf16.msra.mxu0 %v1291
      %2108 = vmatpush.bf16.msra.mxu0 %v1283
      %2109 = vmatmul.bf16.gmra.mxu0 %v167
      %v2110 = vpop.f32.mrf.mxu0
      %v2111 = vadd.f32 %v2098, %v2110
      %v2112 = vpop.f32.mrf.mxu0
      %2113 = vdwg.mxu0
      %2114 = vmatpush.bf16.msra.mxu0 %v1403
      %2115 = vmatpush.bf16.msra.mxu0 %v1395
      %2116 = vmatpush.bf16.msra.mxu0 %v1387
      %2117 = vmatpush.bf16.msra.mxu0 %v1379
      %2118 = vmatpush.bf16.msra.mxu0 %v1371
      %2119 = vmatpush.bf16.msra.mxu0 %v1363
      %2120 = vmatpush.bf16.msra.mxu0 %v1355
      %2121 = vmatpush.bf16.msra.mxu0 %v1347
      %2122 = vmatmul.bf16.gmra.mxu0 %v168
      %v2123 = vpop.f32.mrf.mxu0
      %v2124 = vadd.f32 %v2111, %v2123
      %v2125 = vpop.f32.mrf.mxu0
      %2126 = vdwg.mxu0
      %2127 = vmatpush.bf16.msra.mxu0 %v1467
      %2128 = vmatpush.bf16.msra.mxu0 %v1459
      %2129 = vmatpush.bf16.msra.mxu0 %v1451
      %2130 = vmatpush.bf16.msra.mxu0 %v1443
      %2131 = vmatpush.bf16.msra.mxu0 %v1435
      %2132 = vmatpush.bf16.msra.mxu0 %v1427
      %2133 = vmatpush.bf16.msra.mxu0 %v1419
      %2134 = vmatpush.bf16.msra.mxu0 %v1411
      %2135 = vmatmul.bf16.gmra.mxu0 %v169
      %v2136 = vpop.f32.mrf.mxu0
      %v2137 = vadd.f32 %v2124, %v2136
      %v2138 = vpop.f32.mrf.mxu0
      %2139 = vdwg.mxu0
      %v2140 = vmax.f32 %v1773, 0.0
      %v2141 = vmax.f32 %v1825, 0.0
      %v2142 = vmax.f32 %v1877, 0.0
      %v2143 = vmax.f32 %v1929, 0.0
      %v2144 = vmax.f32 %v1981, 0.0
      %v2145 = vmax.f32 %v2033, 0.0
      %v2146 = vmax.f32 %v2085, 0.0
      %v2147 = vmax.f32 %v2137, 0.0
      %v2148 = vpack.c.bf16 %v2141, %v2140
      %v2149 = vpack.c.bf16 %v2143, %v2142
      %v2150 = vpack.c.bf16 %v2145, %v2144
      %v2151 = vpack.c.bf16 %v2147, %v2146
      %2152 = vst [vmem:[#allocation2] sm:$0xff] %v2148
      %2153 = vst [vmem:[#allocation2 + $0x8] sm:$0xff] %v2149
      %2154 = vst [vmem:[#allocation2 + $0x10] sm:$0xff] %v2150
      %2155 = vst [vmem:[#allocation2 + $0x18] sm:$0xff] %v2151
    $region37: #{decoder_forward.1} parent=1 // pred_fallthru
      _
    %v2156 = vld [vmem:[#allocation2] sm:$0xff]
    %v2157 = vld [vmem:[#allocation2 + $0x8] sm:$0xff]
    %v2158 = vld [vmem:[#allocation2 + $0x10] sm:$0xff]
    %v2159 = vld [vmem:[#allocation2 + $0x18] sm:$0xff]
    %v2160 = vld [vmem:[%s5] sm:$0xf]
    %v2161 = vld [vmem:[%s5 + $0x4] sm:$0xf]
    %v2162 = vld [vmem:[%s5 + $0x8] sm:$0xf]
    %v2163 = vld [vmem:[%s5 + $0xc] sm:$0xf]
    %v2164 = vld [vmem:[%s5 + $0x10] sm:$0xf]
    %v2165 = vld [vmem:[%s5 + $0x14] sm:$0xf]
    %v2166 = vld [vmem:[%s5 + $0x18] sm:$0xf]
    %v2167 = vld [vmem:[%s5 + $0x1c] sm:$0xf]
    %v2168 = vld [vmem:[%s5 + $0x20] sm:$0xf]
    %v2169 = vld [vmem:[%s5 + $0x24] sm:$0xf]
    %v2170 = vld [vmem:[%s5 + $0x28] sm:$0xf]
    %v2171 = vld [vmem:[%s5 + $0x2c] sm:$0xf]
    %v2172 = vld [vmem:[%s5 + $0x30] sm:$0xf]
    %v2173 = vld [vmem:[%s5 + $0x34] sm:$0xf]
    %v2174 = vld [vmem:[%s5 + $0x38] sm:$0xf]
    %v2175 = vld [vmem:[%s5 + $0x3c] sm:$0xf]
    %v2176 = vld [vmem:[%s5 + $0x40] sm:$0xf]
    %v2177 = vld [vmem:[%s5 + $0x44] sm:$0xf]
    %v2178 = vld [vmem:[%s5 + $0x48] sm:$0xf]
    %v2179 = vld [vmem:[%s5 + $0x4c] sm:$0xf]
    %v2180 = vld [vmem:[%s5 + $0x50] sm:$0xf]
    %v2181 = vld [vmem:[%s5 + $0x54] sm:$0xf]
    %v2182 = vld [vmem:[%s5 + $0x58] sm:$0xf]
    %v2183 = vld [vmem:[%s5 + $0x5c] sm:$0xf]
    %v2184 = vld [vmem:[%s5 + $0x60] sm:$0xf]
    %v2185 = vld [vmem:[%s5 + $0x64] sm:$0xf]
    %v2186 = vld [vmem:[%s5 + $0x68] sm:$0xf]
    %v2187 = vld [vmem:[%s5 + $0x6c] sm:$0xf]
    %v2188 = vld [vmem:[%s5 + $0x70] sm:$0xf]
    %v2189 = vld [vmem:[%s5 + $0x74] sm:$0xf]
    %v2190 = vld [vmem:[%s5 + $0x78] sm:$0xf]
    %v2191 = vld [vmem:[%s5 + $0x7c] sm:$0xf]
    %v2192 = vld [vmem:[%s5 + $0x80] sm:$0xf]
    %v2193 = vld [vmem:[%s5 + $0x84] sm:$0xf]
    %v2194 = vld [vmem:[%s5 + $0x88] sm:$0xf]
    %v2195 = vld [vmem:[%s5 + $0x8c] sm:$0xf]
    %v2196 = vld [vmem:[%s5 + $0x90] sm:$0xf]
    %v2197 = vld [vmem:[%s5 + $0x94] sm:$0xf]
    %v2198 = vld [vmem:[%s5 + $0x98] sm:$0xf]
    %v2199 = vld [vmem:[%s5 + $0x9c] sm:$0xf]
    %v2200 = vld [vmem:[%s5 + $0xa0] sm:$0xf]
    %v2201 = vld [vmem:[%s5 + $0xa4] sm:$0xf]
    %v2202 = vld [vmem:[%s5 + $0xa8] sm:$0xf]
    %v2203 = vld [vmem:[%s5 + $0xac] sm:$0xf]
    %v2204 = vld [vmem:[%s5 + $0xb0] sm:$0xf]
    %v2205 = vld [vmem:[%s5 + $0xb4] sm:$0xf]
    %v2206 = vld [vmem:[%s5 + $0xb8] sm:$0xf]
    %v2207 = vld [vmem:[%s5 + $0xbc] sm:$0xf]
    %v2208 = vld [vmem:[%s5 + $0xc0] sm:$0xf]
    %v2209 = vld [vmem:[%s5 + $0xc4] sm:$0xf]
    %v2210 = vld [vmem:[%s5 + $0xc8] sm:$0xf]
    %v2211 = vld [vmem:[%s5 + $0xcc] sm:$0xf]
    %v2212 = vld [vmem:[%s5 + $0xd0] sm:$0xf]
    %v2213 = vld [vmem:[%s5 + $0xd4] sm:$0xf]
    %v2214 = vld [vmem:[%s5 + $0xd8] sm:$0xf]
    %v2215 = vld [vmem:[%s5 + $0xdc] sm:$0xf]
    %v2216 = vld [vmem:[%s5 + $0xe0] sm:$0xf]
    %v2217 = vld [vmem:[%s5 + $0xe4] sm:$0xf]
    %v2218 = vld [vmem:[%s5 + $0xe8] sm:$0xf]
    %v2219 = vld [vmem:[%s5 + $0xec] sm:$0xf]
    %v2220 = vld [vmem:[%s5 + $0xf0] sm:$0xf]
    %v2221 = vld [vmem:[%s5 + $0xf4] sm:$0xf]
    %v2222 = vld [vmem:[%s5 + $0xf8] sm:$0xf]
    %v2223 = vld [vmem:[%s5 + $0xfc] sm:$0xf]
    %v2224 = vld [vmem:[%s5 + $0x100] sm:$0xf]
    %v2225 = vld [vmem:[%s5 + $0x104] sm:$0xf]
    %v2226 = vld [vmem:[%s5 + $0x108] sm:$0xf]
    %v2227 = vld [vmem:[%s5 + $0x10c] sm:$0xf]
    %v2228 = vld [vmem:[%s5 + $0x110] sm:$0xf]
    %v2229 = vld [vmem:[%s5 + $0x114] sm:$0xf]
    %v2230 = vld [vmem:[%s5 + $0x118] sm:$0xf]
    %v2231 = vld [vmem:[%s5 + $0x11c] sm:$0xf]
    %v2232 = vld [vmem:[%s5 + $0x120] sm:$0xf]
    %v2233 = vld [vmem:[%s5 + $0x124] sm:$0xf]
    %v2234 = vld [vmem:[%s5 + $0x128] sm:$0xf]
    %v2235 = vld [vmem:[%s5 + $0x12c] sm:$0xf]
    %v2236 = vld [vmem:[%s5 + $0x130] sm:$0xf]
    %v2237 = vld [vmem:[%s5 + $0x134] sm:$0xf]
    %v2238 = vld [vmem:[%s5 + $0x138] sm:$0xf]
    %v2239 = vld [vmem:[%s5 + $0x13c] sm:$0xf]
    %v2240 = vld [vmem:[%s5 + $0x140] sm:$0xf]
    %v2241 = vld [vmem:[%s5 + $0x144] sm:$0xf]
    %v2242 = vld [vmem:[%s5 + $0x148] sm:$0xf]
    %v2243 = vld [vmem:[%s5 + $0x14c] sm:$0xf]
    %v2244 = vld [vmem:[%s5 + $0x150] sm:$0xf]
    %v2245 = vld [vmem:[%s5 + $0x154] sm:$0xf]
    %v2246 = vld [vmem:[%s5 + $0x158] sm:$0xf]
    %v2247 = vld [vmem:[%s5 + $0x15c] sm:$0xf]
    %v2248 = vld [vmem:[%s5 + $0x160] sm:$0xf]
    %v2249 = vld [vmem:[%s5 + $0x164] sm:$0xf]
    %v2250 = vld [vmem:[%s5 + $0x168] sm:$0xf]
    %v2251 = vld [vmem:[%s5 + $0x16c] sm:$0xf]
    %v2252 = vld [vmem:[%s5 + $0x170] sm:$0xf]
    %v2253 = vld [vmem:[%s5 + $0x174] sm:$0xf]
    %v2254 = vld [vmem:[%s5 + $0x178] sm:$0xf]
    %v2255 = vld [vmem:[%s5 + $0x17c] sm:$0xf]
    %v2256 = vld [vmem:[%s5 + $0x180] sm:$0xf]
    %v2257 = vld [vmem:[%s5 + $0x184] sm:$0xf]
    %v2258 = vld [vmem:[%s5 + $0x188] sm:$0xf]
    %v2259 = vld [vmem:[%s5 + $0x18c] sm:$0xf]
    %v2260 = vld [vmem:[%s5 + $0x190] sm:$0xf]
    %v2261 = vld [vmem:[%s5 + $0x194] sm:$0xf]
    %v2262 = vld [vmem:[%s5 + $0x198] sm:$0xf]
    %v2263 = vld [vmem:[%s5 + $0x19c] sm:$0xf]
    %v2264 = vld [vmem:[%s5 + $0x1a0] sm:$0xf]
    %v2265 = vld [vmem:[%s5 + $0x1a4] sm:$0xf]
    %v2266 = vld [vmem:[%s5 + $0x1a8] sm:$0xf]
    %v2267 = vld [vmem:[%s5 + $0x1ac] sm:$0xf]
    %v2268 = vld [vmem:[%s5 + $0x1b0] sm:$0xf]
    %v2269 = vld [vmem:[%s5 + $0x1b4] sm:$0xf]
    %v2270 = vld [vmem:[%s5 + $0x1b8] sm:$0xf]
    %v2271 = vld [vmem:[%s5 + $0x1bc] sm:$0xf]
    %v2272 = vld [vmem:[%s5 + $0x1c0] sm:$0xf]
    %v2273 = vld [vmem:[%s5 + $0x1c4] sm:$0xf]
    %v2274 = vld [vmem:[%s5 + $0x1c8] sm:$0xf]
    %v2275 = vld [vmem:[%s5 + $0x1cc] sm:$0xf]
    %v2276 = vld [vmem:[%s5 + $0x1d0] sm:$0xf]
    %v2277 = vld [vmem:[%s5 + $0x1d4] sm:$0xf]
    %v2278 = vld [vmem:[%s5 + $0x1d8] sm:$0xf]
    %v2279 = vld [vmem:[%s5 + $0x1dc] sm:$0xf]
    %v2280 = vld [vmem:[%s5 + $0x1e0] sm:$0xf]
    %v2281 = vld [vmem:[%s5 + $0x1e4] sm:$0xf]
    %v2282 = vld [vmem:[%s5 + $0x1e8] sm:$0xf]
    %v2283 = vld [vmem:[%s5 + $0x1ec] sm:$0xf]
    %v2284 = vld [vmem:[%s5 + $0x1f0] sm:$0xf]
    %v2285 = vld [vmem:[%s5 + $0x1f4] sm:$0xf]
    %v2286 = vld [vmem:[%s5 + $0x1f8] sm:$0xf]
    %v2287 = vld [vmem:[%s5 + $0x1fc] sm:$0xf]
    %v2288 = vld [vmem:[%s6] sm:$0x1]
    %v2290 = vperm.slane %v2288, 0
    %v2296 = vunpack.c.l.b16 %v2156
    %v2297 = vunpack.c.h.b16 %v2156
    %v2298 = vunpack.c.l.b16 %v2157
    %v2299 = vunpack.c.h.b16 %v2157
    %v2300 = vunpack.c.l.b16 %v2158
    %v2301 = vunpack.c.h.b16 %v2158
    %v2302 = vunpack.c.l.b16 %v2159
    %v2303 = vunpack.c.h.b16 %v2159
    %v2304 = vpack.c.b16 %v2296, %v2296
    %v2305 = vpack.c.b16 %v2297, %v2297
    %v2306 = vpack.c.b16 %v2298, %v2298
    %v2307 = vpack.c.b16 %v2299, %v2299
    %v2308 = vpack.c.b16 %v2300, %v2300
    %v2309 = vpack.c.b16 %v2301, %v2301
    %v2310 = vpack.c.b16 %v2302, %v2302
    %v2311 = vpack.c.b16 %v2303, %v2303
    %v2448 = vunpack.c.l.b16 %v2160
    %v2449 = vunpack.c.l.b16 %v2161
    %v2450 = vunpack.c.l.b16 %v2162
    %v2451 = vunpack.c.l.b16 %v2163
    %v2452 = vunpack.c.l.b16 %v2164
    %v2453 = vunpack.c.l.b16 %v2165
    %v2454 = vunpack.c.l.b16 %v2166
    %v2455 = vunpack.c.l.b16 %v2167
    %v2456 = vunpack.c.l.b16 %v2168
    %v2457 = vunpack.c.l.b16 %v2169
    %v2458 = vunpack.c.l.b16 %v2170
    %v2459 = vunpack.c.l.b16 %v2171
    %v2460 = vunpack.c.l.b16 %v2172
    %v2461 = vunpack.c.l.b16 %v2173
    %v2462 = vunpack.c.l.b16 %v2174
    %v2463 = vunpack.c.l.b16 %v2175
    %v2464 = vunpack.c.l.b16 %v2176
    %v2465 = vunpack.c.l.b16 %v2177
    %v2466 = vunpack.c.l.b16 %v2178
    %v2467 = vunpack.c.l.b16 %v2179
    %v2468 = vunpack.c.l.b16 %v2180
    %v2469 = vunpack.c.l.b16 %v2181
    %v2470 = vunpack.c.l.b16 %v2182
    %v2471 = vunpack.c.l.b16 %v2183
    %v2472 = vunpack.c.l.b16 %v2184
    %v2473 = vunpack.c.l.b16 %v2185
    %v2474 = vunpack.c.l.b16 %v2186
    %v2475 = vunpack.c.l.b16 %v2187
    %v2476 = vunpack.c.l.b16 %v2188
    %v2477 = vunpack.c.l.b16 %v2189
    %v2478 = vunpack.c.l.b16 %v2190
    %v2479 = vunpack.c.l.b16 %v2191
    %v2480 = vunpack.c.l.b16 %v2192
    %v2481 = vunpack.c.l.b16 %v2193
    %v2482 = vunpack.c.l.b16 %v2194
    %v2483 = vunpack.c.l.b16 %v2195
    %v2484 = vunpack.c.l.b16 %v2196
    %v2485 = vunpack.c.l.b16 %v2197
    %v2486 = vunpack.c.l.b16 %v2198
    %v2487 = vunpack.c.l.b16 %v2199
    %v2488 = vunpack.c.l.b16 %v2200
    %v2489 = vunpack.c.l.b16 %v2201
    %v2490 = vunpack.c.l.b16 %v2202
    %v2491 = vunpack.c.l.b16 %v2203
    %v2492 = vunpack.c.l.b16 %v2204
    %v2493 = vunpack.c.l.b16 %v2205
    %v2494 = vunpack.c.l.b16 %v2206
    %v2495 = vunpack.c.l.b16 %v2207
    %v2496 = vunpack.c.l.b16 %v2208
    %v2497 = vunpack.c.l.b16 %v2209
    %v2498 = vunpack.c.l.b16 %v2210
    %v2499 = vunpack.c.l.b16 %v2211
    %v2500 = vunpack.c.l.b16 %v2212
    %v2501 = vunpack.c.l.b16 %v2213
    %v2502 = vunpack.c.l.b16 %v2214
    %v2503 = vunpack.c.l.b16 %v2215
    %v2504 = vunpack.c.l.b16 %v2216
    %v2505 = vunpack.c.l.b16 %v2217
    %v2506 = vunpack.c.l.b16 %v2218
    %v2507 = vunpack.c.l.b16 %v2219
    %v2508 = vunpack.c.l.b16 %v2220
    %v2509 = vunpack.c.l.b16 %v2221
    %v2510 = vunpack.c.l.b16 %v2222
    %v2511 = vunpack.c.l.b16 %v2223
    %v2512 = vunpack.c.l.b16 %v2224
    %v2513 = vunpack.c.l.b16 %v2225
    %v2514 = vunpack.c.l.b16 %v2226
    %v2515 = vunpack.c.l.b16 %v2227
    %v2516 = vunpack.c.l.b16 %v2228
    %v2517 = vunpack.c.l.b16 %v2229
    %v2518 = vunpack.c.l.b16 %v2230
    %v2519 = vunpack.c.l.b16 %v2231
    %v2520 = vunpack.c.l.b16 %v2232
    %v2521 = vunpack.c.l.b16 %v2233
    %v2522 = vunpack.c.l.b16 %v2234
    %v2523 = vunpack.c.l.b16 %v2235
    %v2524 = vunpack.c.l.b16 %v2236
    %v2525 = vunpack.c.l.b16 %v2237
    %v2526 = vunpack.c.l.b16 %v2238
    %v2527 = vunpack.c.l.b16 %v2239
    %v2528 = vunpack.c.l.b16 %v2240
    %v2529 = vunpack.c.l.b16 %v2241
    %v2530 = vunpack.c.l.b16 %v2242
    %v2531 = vunpack.c.l.b16 %v2243
    %v2532 = vunpack.c.l.b16 %v2244
    %v2533 = vunpack.c.l.b16 %v2245
    %v2534 = vunpack.c.l.b16 %v2246
    %v2535 = vunpack.c.l.b16 %v2247
    %v2536 = vunpack.c.l.b16 %v2248
    %v2537 = vunpack.c.l.b16 %v2249
    %v2538 = vunpack.c.l.b16 %v2250
    %v2539 = vunpack.c.l.b16 %v2251
    %v2540 = vunpack.c.l.b16 %v2252
    %v2541 = vunpack.c.l.b16 %v2253
    %v2542 = vunpack.c.l.b16 %v2254
    %v2543 = vunpack.c.l.b16 %v2255
    %v2544 = vunpack.c.l.b16 %v2256
    %v2545 = vunpack.c.l.b16 %v2257
    %v2546 = vunpack.c.l.b16 %v2258
    %v2547 = vunpack.c.l.b16 %v2259
    %v2548 = vunpack.c.l.b16 %v2260
    %v2549 = vunpack.c.l.b16 %v2261
    %v2550 = vunpack.c.l.b16 %v2262
    %v2551 = vunpack.c.l.b16 %v2263
    %v2552 = vunpack.c.l.b16 %v2264
    %v2553 = vunpack.c.l.b16 %v2265
    %v2554 = vunpack.c.l.b16 %v2266
    %v2555 = vunpack.c.l.b16 %v2267
    %v2556 = vunpack.c.l.b16 %v2268
    %v2557 = vunpack.c.l.b16 %v2269
    %v2558 = vunpack.c.l.b16 %v2270
    %v2559 = vunpack.c.l.b16 %v2271
    %v2560 = vunpack.c.l.b16 %v2272
    %v2561 = vunpack.c.l.b16 %v2273
    %v2562 = vunpack.c.l.b16 %v2274
    %v2563 = vunpack.c.l.b16 %v2275
    %v2564 = vunpack.c.l.b16 %v2276
    %v2565 = vunpack.c.l.b16 %v2277
    %v2566 = vunpack.c.l.b16 %v2278
    %v2567 = vunpack.c.l.b16 %v2279
    %v2568 = vunpack.c.l.b16 %v2280
    %v2569 = vunpack.c.l.b16 %v2281
    %v2570 = vunpack.c.l.b16 %v2282
    %v2571 = vunpack.c.l.b16 %v2283
    %v2572 = vunpack.c.l.b16 %v2284
    %v2573 = vunpack.c.l.b16 %v2285
    %v2574 = vunpack.c.l.b16 %v2286
    %v2575 = vunpack.c.l.b16 %v2287
    %v2576 = vpack.c.b16 %v2449, %v2448
    %v2577 = vpack.c.b16 %v2451, %v2450
    %v2578 = vpack.c.b16 %v2453, %v2452
    %v2579 = vpack.c.b16 %v2455, %v2454
    %v2580 = vpack.c.b16 %v2457, %v2456
    %v2581 = vpack.c.b16 %v2459, %v2458
    %v2582 = vpack.c.b16 %v2461, %v2460
    %v2583 = vpack.c.b16 %v2463, %v2462
    %v2584 = vpack.c.b16 %v2465, %v2464
    %v2585 = vpack.c.b16 %v2467, %v2466
    %v2586 = vpack.c.b16 %v2469, %v2468
    %v2587 = vpack.c.b16 %v2471, %v2470
    %v2588 = vpack.c.b16 %v2473, %v2472
    %v2589 = vpack.c.b16 %v2475, %v2474
    %v2590 = vpack.c.b16 %v2477, %v2476
    %v2591 = vpack.c.b16 %v2479, %v2478
    %v2592 = vpack.c.b16 %v2481, %v2480
    %v2593 = vpack.c.b16 %v2483, %v2482
    %v2594 = vpack.c.b16 %v2485, %v2484
    %v2595 = vpack.c.b16 %v2487, %v2486
    %v2596 = vpack.c.b16 %v2489, %v2488
    %v2597 = vpack.c.b16 %v2491, %v2490
    %v2598 = vpack.c.b16 %v2493, %v2492
    %v2599 = vpack.c.b16 %v2495, %v2494
    %v2600 = vpack.c.b16 %v2497, %v2496
    %v2601 = vpack.c.b16 %v2499, %v2498
    %v2602 = vpack.c.b16 %v2501, %v2500
    %v2603 = vpack.c.b16 %v2503, %v2502
    %v2604 = vpack.c.b16 %v2505, %v2504
    %v2605 = vpack.c.b16 %v2507, %v2506
    %v2606 = vpack.c.b16 %v2509, %v2508
    %v2607 = vpack.c.b16 %v2511, %v2510
    %v2608 = vpack.c.b16 %v2513, %v2512
    %v2609 = vpack.c.b16 %v2515, %v2514
    %v2610 = vpack.c.b16 %v2517, %v2516
    %v2611 = vpack.c.b16 %v2519, %v2518
    %v2612 = vpack.c.b16 %v2521, %v2520
    %v2613 = vpack.c.b16 %v2523, %v2522
    %v2614 = vpack.c.b16 %v2525, %v2524
    %v2615 = vpack.c.b16 %v2527, %v2526
    %v2616 = vpack.c.b16 %v2529, %v2528
    %v2617 = vpack.c.b16 %v2531, %v2530
    %v2618 = vpack.c.b16 %v2533, %v2532
    %v2619 = vpack.c.b16 %v2535, %v2534
    %v2620 = vpack.c.b16 %v2537, %v2536
    %v2621 = vpack.c.b16 %v2539, %v2538
    %v2622 = vpack.c.b16 %v2541, %v2540
    %v2623 = vpack.c.b16 %v2543, %v2542
    %v2624 = vpack.c.b16 %v2545, %v2544
    %v2625 = vpack.c.b16 %v2547, %v2546
    %v2626 = vpack.c.b16 %v2549, %v2548
    %v2627 = vpack.c.b16 %v2551, %v2550
    %v2628 = vpack.c.b16 %v2553, %v2552
    %v2629 = vpack.c.b16 %v2555, %v2554
    %v2630 = vpack.c.b16 %v2557, %v2556
    %v2631 = vpack.c.b16 %v2559, %v2558
    %v2632 = vpack.c.b16 %v2561, %v2560
    %v2633 = vpack.c.b16 %v2563, %v2562
    %v2634 = vpack.c.b16 %v2565, %v2564
    %v2635 = vpack.c.b16 %v2567, %v2566
    %v2636 = vpack.c.b16 %v2569, %v2568
    %v2637 = vpack.c.b16 %v2571, %v2570
    %v2638 = vpack.c.b16 %v2573, %v2572
    %v2639 = vpack.c.b16 %v2575, %v2574
    %2704 = vmatpush.bf16.msra.mxu0 %v2583
    %2705 = vmatpush.bf16.msra.mxu0 %v2582
    %2706 = vmatpush.bf16.msra.mxu0 %v2581
    %2707 = vmatpush.bf16.msra.mxu0 %v2580
    %2708 = vmatpush.bf16.msra.mxu0 %v2579
    %2709 = vmatpush.bf16.msra.mxu0 %v2578
    %2710 = vmatpush.bf16.msra.mxu0 %v2577
    %2711 = vmatpush.bf16.msra.mxu0 %v2576
    %2712 = vmatmul.bf16.gmra.mxu0 %v2304
    %v2713 = vpop.f32.mrf.mxu0
    %v2714 = vadd.f32 %v2290, %v2713
    %v2715 = vpop.f32.mrf.mxu0
    %2716 = vdwg.mxu0
    %2717 = vmatpush.bf16.msra.mxu0 %v2591
    %2718 = vmatpush.bf16.msra.mxu0 %v2590
    %2719 = vmatpush.bf16.msra.mxu0 %v2589
    %2720 = vmatpush.bf16.msra.mxu0 %v2588
    %2721 = vmatpush.bf16.msra.mxu0 %v2587
    %2722 = vmatpush.bf16.msra.mxu0 %v2586
    %2723 = vmatpush.bf16.msra.mxu0 %v2585
    %2724 = vmatpush.bf16.msra.mxu0 %v2584
    %2725 = vmatmul.bf16.gmra.mxu0 %v2305
    %v2726 = vpop.f32.mrf.mxu0
    %v2727 = vadd.f32 %v2714, %v2726
    %v2728 = vpop.f32.mrf.mxu0
    %2729 = vdwg.mxu0
    %2730 = vmatpush.bf16.msra.mxu0 %v2599
    %2731 = vmatpush.bf16.msra.mxu0 %v2598
    %2732 = vmatpush.bf16.msra.mxu0 %v2597
    %2733 = vmatpush.bf16.msra.mxu0 %v2596
    %2734 = vmatpush.bf16.msra.mxu0 %v2595
    %2735 = vmatpush.bf16.msra.mxu0 %v2594
    %2736 = vmatpush.bf16.msra.mxu0 %v2593
    %2737 = vmatpush.bf16.msra.mxu0 %v2592
    %2738 = vmatmul.bf16.gmra.mxu0 %v2306
    %v2739 = vpop.f32.mrf.mxu0
    %v2740 = vadd.f32 %v2727, %v2739
    %v2741 = vpop.f32.mrf.mxu0
    %2742 = vdwg.mxu0
    %2743 = vmatpush.bf16.msra.mxu0 %v2607
    %2744 = vmatpush.bf16.msra.mxu0 %v2606
    %2745 = vmatpush.bf16.msra.mxu0 %v2605
    %2746 = vmatpush.bf16.msra.mxu0 %v2604
    %2747 = vmatpush.bf16.msra.mxu0 %v2603
    %2748 = vmatpush.bf16.msra.mxu0 %v2602
    %2749 = vmatpush.bf16.msra.mxu0 %v2601
    %2750 = vmatpush.bf16.msra.mxu0 %v2600
    %2751 = vmatmul.bf16.gmra.mxu0 %v2307
    %v2752 = vpop.f32.mrf.mxu0
    %v2753 = vadd.f32 %v2740, %v2752
    %v2754 = vpop.f32.mrf.mxu0
    %2755 = vdwg.mxu0
    %2756 = vmatpush.bf16.msra.mxu0 %v2615
    %2757 = vmatpush.bf16.msra.mxu0 %v2614
    %2758 = vmatpush.bf16.msra.mxu0 %v2613
    %2759 = vmatpush.bf16.msra.mxu0 %v2612
    %2760 = vmatpush.bf16.msra.mxu0 %v2611
    %2761 = vmatpush.bf16.msra.mxu0 %v2610
    %2762 = vmatpush.bf16.msra.mxu0 %v2609
    %2763 = vmatpush.bf16.msra.mxu0 %v2608
    %2764 = vmatmul.bf16.gmra.mxu0 %v2308
    %v2765 = vpop.f32.mrf.mxu0
    %v2766 = vadd.f32 %v2753, %v2765
    %v2767 = vpop.f32.mrf.mxu0
    %2768 = vdwg.mxu0
    %2769 = vmatpush.bf16.msra.mxu0 %v2623
    %2770 = vmatpush.bf16.msra.mxu0 %v2622
    %2771 = vmatpush.bf16.msra.mxu0 %v2621
    %2772 = vmatpush.bf16.msra.mxu0 %v2620
    %2773 = vmatpush.bf16.msra.mxu0 %v2619
    %2774 = vmatpush.bf16.msra.mxu0 %v2618
    %2775 = vmatpush.bf16.msra.mxu0 %v2617
    %2776 = vmatpush.bf16.msra.mxu0 %v2616
    %2777 = vmatmul.bf16.gmra.mxu0 %v2309
    %v2778 = vpop.f32.mrf.mxu0
    %v2779 = vadd.f32 %v2766, %v2778
    %v2780 = vpop.f32.mrf.mxu0
    %2781 = vdwg.mxu0
    %2782 = vmatpush.bf16.msra.mxu0 %v2631
    %2783 = vmatpush.bf16.msra.mxu0 %v2630
    %2784 = vmatpush.bf16.msra.mxu0 %v2629
    %2785 = vmatpush.bf16.msra.mxu0 %v2628
    %2786 = vmatpush.bf16.msra.mxu0 %v2627
    %2787 = vmatpush.bf16.msra.mxu0 %v2626
    %2788 = vmatpush.bf16.msra.mxu0 %v2625
    %2789 = vmatpush.bf16.msra.mxu0 %v2624
    %2790 = vmatmul.bf16.gmra.mxu0 %v2310
    %v2791 = vpop.f32.mrf.mxu0
    %v2792 = vadd.f32 %v2779, %v2791
    %v2793 = vpop.f32.mrf.mxu0
    %2794 = vdwg.mxu0
    %2795 = vmatpush.bf16.msra.mxu0 %v2639
    %2796 = vmatpush.bf16.msra.mxu0 %v2638
    %2797 = vmatpush.bf16.msra.mxu0 %v2637
    %2798 = vmatpush.bf16.msra.mxu0 %v2636
    %2799 = vmatpush.bf16.msra.mxu0 %v2635
    %2800 = vmatpush.bf16.msra.mxu0 %v2634
    %2801 = vmatpush.bf16.msra.mxu0 %v2633
    %2802 = vmatpush.bf16.msra.mxu0 %v2632
    %2803 = vmatmul.bf16.gmra.mxu0 %v2311
    %v2804 = vpop.f32.mrf.mxu0
    %v2805 = vadd.f32 %v2792, %v2804
    %v2806 = vpop.f32.mrf.mxu0
    %2807 = vdwg.mxu0
    %v2808 = vxor.u32 %v2805, 2147483648
    %v2809 = vmul.f32 %v2808, 1.442695
    %v2810 = vpow.pop %v2809
    %v2811 = vadd.f32 %v2810, 1.0
    %v2812 = vrcp.pop %v2811
    %v2813 = vmul.f32 %v2811, %v2812
    %v2814 = vsub.f32 1.0, %v2813
    %v2815 = vmul.f32 %v2812, %v2814
    %v2816 = vadd.f32 %v2812, %v2815
    %vm2817 = vweird.f32 %v2811
    %vm2818 = vweird.f32 %v2812
    %vm2819 = vmor %vm2817, %vm2818
    %v2820 = vsel %vm2819, %v2812, %v2816
    %v2821 = vand.u32 2147483647, %v2811
    %vm2822 = vcmp.eq.f32.partialorder %v2821, 8.507059e+37
    %v2823 = vand.u32 %v2811, 2147483648
    %v2824 = vor.u32 1.1754944e-38, %v2823
    %v2825 = vsel %vm2822, %v2824, %v2820
    %v2826 = vmul.f32 1.0, %v2825
    %2827 = vst [vmem:[%s7] sm:$0xff] %v2826
    // Predicated region
    $region38: #{decoder_forward.1} parent=1 // pred_check
      _
    $region39: #{decoder_forward.1} parent=1 // pred_check_branch
      %2829 = sbr.rel (0) target = $region41
    $region40: #{decoder_forward.1} parent=1 // pred_region
      _
    $region41: #{decoder_forward.1} parent=1 // pred_fallthru
      _
    // Predicated region
    $region42: #{decoder_forward.1} parent=1 // pred_check
      _
    $region43: #{decoder_forward.1} parent=1 // pred_check_branch
      %2831 = sbr.rel (0) target = $region45
    $region44: #{decoder_forward.1} parent=1 // pred_region
      _
    $region45: #{decoder_forward.1} parent=1 // pred_fallthru
      _
    %2832 = vsyncpa [#allocation4], 1

</llo_original>
